<compile_context>
chip_gen: v5e
topology: v5e:2x2
jax: 0.10.0
libtpu: 0.0.40
codegen_flags: <defaults>
</compile_context>

<pallas_src>
import numpy as np
import jax
import jax.numpy as jnp
from jax.experimental import pallas as pl
from jax.experimental.pallas import tpu as pltpu

RES_MAX_NATOMS = 15


def _elu(x):
    # F.elu with alpha=1
    return jnp.where(x > 0, x, jnp.exp(x) - 1.0)


# ---------------------------------------------------------------------------
# Fused kernel: MDN heads (pi | sigma | mu) + residue-residue min distance.
# grid = (B,); one step handles one batch element.
# ---------------------------------------------------------------------------
def gm_kernel(hl_ref, ht_ref, w1t_ref, b1c_ref, wht_ref, bhc_ref,
              x_ref, y_ref, mdn_ref, dist_ref):
    N_l, H = hl_ref.shape[1], hl_ref.shape[2]
    N_t = ht_ref.shape[1]
    G3 = wht_ref.shape[0]
    G = G3 // 3
    A = x_ref.shape[2]
    M = x_ref.shape[3]

    # ------------------------- MDN branch (MXU + EUP) -------------------------
    hl = hl_ref[0]                                    # [N_l, H]
    ht = ht_ref[0]                                    # [N_t, H]
    # pair slab: C[l*N_t + t, :] = hl[l] + ht[t]  (leading-dim collapse only)
    C = (hl[:, None, :] + ht[None, :, :]).reshape(N_l * N_t, H)
    # one 2-D transpose -> everything downstream is lane-dense ([*, M] slabs)
    Ct = jnp.transpose(C).astype(jnp.bfloat16)        # [H, M]

    # Linear + folded BatchNorm (inference) + ELU; bf16 MXU, f32 accumulate
    hpre = jnp.dot(w1t_ref[...], Ct,
                   preferred_element_type=jnp.float32) + b1c_ref[...]
    h = _elu(hpre)                                    # [H, M]
    # TODO(synk): Dropout(p=0.15) is identity in eval mode; no RNG here.

    # fused head matmul: [3G, H] @ [H, M] -> [3G, M]
    zt = jnp.dot(wht_ref[...], h.astype(jnp.bfloat16),
                 preferred_element_type=jnp.float32) + bhc_ref[...]

    # pi head: softmax over the gaussian axis (sublane axis in this layout)
    zp = zt[0:G, :]
    zp = zp - jnp.max(zp, axis=0, keepdims=True)
    e = jnp.exp(zp)
    inv = pl.reciprocal(jnp.sum(e, axis=0, keepdims=True), approx=False)
    mdn_ref[0, 0:G, :] = e * inv
    # sigma / mu heads; row ranges are vreg-aligned, stores are lane-dense
    mdn_ref[0, G:2 * G, :] = _elu(zt[G:2 * G, :]) + 1.1
    mdn_ref[0, 2 * G:G3, :] = _elu(zt[2 * G:G3, :]) + 1.0

    # ----------------------- distance branch (VPU/XLU) ------------------------
    # coordinate component planes, lane-flattened over (l, t): [A, M]
    x0 = x_ref[0, 0]
    x1 = x_ref[0, 1]
    x2 = x_ref[0, 2]
    y0 = y_ref[0, 0]
    y1 = y_ref[0, 1]
    y2 = y_ref[0, 2]
    xsq = x0 * x0 + x1 * x1 + x2 * x2                 # [A, M]
    ysq = y0 * y0 + y1 * y1 + y2 * y2                 # [A, M]
    nx0 = -2.0 * x0                                   # fold the -2 once
    nx1 = -2.0 * x1
    nx2 = -2.0 * x2

    BIG = 1e8                                         # == 10000**2 (nan_to_num)
    dmin2 = jnp.full((A, M), BIG, jnp.float32)
    # NOTE: xsq stays inside the loop so NaN x-coordinates are caught by the
    # invalid-pair clamp below (matches torch.nan_to_num(sqrt(d2), 10000)).
    for a2 in range(A):                               # fully unrolled (A = 15)
        d2 = (nx0 * y0[a2:a2 + 1, :] + nx1 * y1[a2:a2 + 1, :]
              + nx2 * y2[a2:a2 + 1, :] + xsq + ysq[a2:a2 + 1, :])
        # NaN (NaN-padded atoms) or negative (f32 cancellation) -> excluded
        d2 = jnp.where(d2 >= 0.0, d2, BIG)
        dmin2 = jnp.minimum(dmin2, d2)
    # min over x-atoms, single sqrt, one lane-dense store per batch element
    dist_ref[0] = jnp.sqrt(jnp.min(dmin2, axis=0, keepdims=True))


def _gm_sv_v2_pallas(h_l, h_t, x_flat, y_flat, w1t, b1c, wht, bhc):
    B, N_l, H = h_l.shape
    N_t = h_t.shape[1]
    G3 = wht.shape[0]
    A, M = x_flat.shape[2], x_flat.shape[3]

    grid_spec = pltpu.PrefetchScalarGridSpec(
        num_scalar_prefetch=0,
        grid=(B,),
        in_specs=[
            pl.BlockSpec((1, N_l, H), lambda b: (b, 0, 0)),
            pl.BlockSpec((1, N_t, H), lambda b: (b, 0, 0)),
            pl.BlockSpec((H, H), lambda b: (0, 0)),
            pl.BlockSpec((H, 1), lambda b: (0, 0)),
            pl.BlockSpec((G3, H), lambda b: (0, 0)),
            pl.BlockSpec((G3, 1), lambda b: (0, 0)),
            pl.BlockSpec((1, 3, A, M), lambda b: (b, 0, 0, 0)),
            pl.BlockSpec((1, 3, A, M), lambda b: (b, 0, 0, 0)),
        ],
        out_specs=[
            pl.BlockSpec((1, G3, M), lambda b: (b, 0, 0)),
            pl.BlockSpec((1, 1, M), lambda b: (b, 0, 0)),
        ],
    )
    out_shape = (jax.ShapeDtypeStruct((B, G3, M), jnp.float32),
                 jax.ShapeDtypeStruct((B, 1, M), jnp.float32))
    return pl.pallas_call(
        gm_kernel,
        out_shape=out_shape,
        grid_spec=grid_spec,
        # B >= 2 keeps a parallel axis for v7x's two TensorCores; on v5e/v6e
        # this is a 2-step serial loop (negligible).  VMEM use per step is
        # ~100 KB, far below every generation's scoped limit.
        compiler_params=pltpu.CompilerParams(
            dimension_semantics=("parallel",)),
    )(h_l, h_t, w1t, b1c, wht, bhc, x_flat, y_flat)


# ---------------------------------------------------------------------------
# Parameter init (deterministic, synthetic) and forward
# ---------------------------------------------------------------------------
def init_params(key, hidden_dim, n_gaussians):
    ks = jax.random.split(key, 5)
    H, G = hidden_dim, n_gaussians
    p = {
        "w1": 0.1 * jax.random.normal(ks[0], (H, H), jnp.float32),
        "b1": 0.02 * jax.random.normal(ks[1], (1, H), jnp.float32),
        "w_pi": 0.1 * jax.random.normal(ks[2], (H, G), jnp.float32),
        "b_pi": jnp.zeros((1, G), jnp.float32),
        "w_sigma": 0.1 * jax.random.normal(ks[3], (H, G), jnp.float32),
        "b_sigma": jnp.zeros((1, G), jnp.float32),
        "w_mu": 0.1 * jax.random.normal(ks[4], (H, G), jnp.float32),
        "b_mu": jnp.zeros((1, G), jnp.float32),
    }
    # BatchNorm1d inference: gamma=1, beta=0, running_mean=0, running_var=1
    gamma = jnp.ones((1, H), jnp.float32)
    beta = jnp.zeros((1, H), jnp.float32)
    rmean = jnp.zeros((1, H), jnp.float32)
    rvar = jnp.ones((1, H), jnp.float32)
    scale = gamma / jnp.sqrt(rvar + 1e-5)
    p["bn_scale"] = scale
    p["bn_shift"] = beta - rmean * scale
    return p


@jax.jit
def gm_sv_v2_dense(h_l_x, h_t_x, l_pos, t_pos, params):
    """Dense, device-resident forward (one fused pallas_call under jit)."""
    B, N_l, H = h_l_x.shape
    N_t = h_t_x.shape[1]
    A = l_pos.shape[2]
    G = params["w_pi"].shape[1]
    M = N_l * N_t

    # ---- host-side weight prep (BN fold, transpose, bf16 cast, head fusion)
    scale, shift = params["bn_scale"], params["bn_shift"]
    w1t = jnp.transpose(params["w1"] * scale).astype(jnp.bfloat16)      # [H, H]
    b1c = jnp.transpose(params["b1"] * scale + shift)                   # [H, 1]
    wht = jnp.transpose(jnp.concatenate(
        [params["w_pi"], params["w_sigma"], params["w_mu"]],
        axis=1)).astype(jnp.bfloat16)                                   # [3G, H]
    bhc = jnp.transpose(jnp.concatenate(
        [params["b_pi"], params["b_sigma"], params["b_mu"]], axis=1))   # [3G, 1]

    # ---- lane-flattened coordinate component planes: [B, 3, A, N_l*N_t]
    # (pure layout plumbing in the wrapper; keeps the kernel lane-dense)
    xl = jnp.transpose(l_pos, (0, 3, 2, 1))                    # [B, 3, A, N_l]
    x_flat = jnp.broadcast_to(
        xl[..., None], (B, 3, A, N_l, N_t)).reshape(B, 3, A, M)
    yt = jnp.transpose(t_pos, (0, 3, 2, 1))                    # [B, 3, A, N_t]
    y_flat = jnp.broadcast_to(
        yt[:, :, :, None, :], (B, 3, A, N_l, N_t)).reshape(B, 3, A, M)

    mdn, dist = _gm_sv_v2_pallas(h_l_x, h_t_x, x_flat, y_flat,
                                 w1t, b1c, wht, bhc)

    # split the lane-dense [B, 3G, M] slab back into the module's outputs
    mdn = jnp.transpose(mdn, (0, 2, 1))                        # [B, M, 3G]
    pi = mdn[..., 0:G].reshape(B, N_l, N_t, G)
    sigma = mdn[..., G:2 * G].reshape(B, N_l, N_t, G)
    mu = mdn[..., 2 * G:3 * G].reshape(B, N_l, N_t, G)
    dist = dist.reshape(B, N_l, N_t)
    return pi, sigma, mu, dist


def gm_sv_v2_forward(h_l_x, h_t_x, l_mask, t_mask, l_pos, t_pos, params):
    dense = gm_sv_v2_dense(h_l_x, h_t_x, l_pos, t_pos, params)
    pi_d, sig_d, mu_d, dist_d = dense

    B, N_l = l_mask.shape
    N_t = t_mask.shape[1]
    C_mask = np.asarray(l_mask)[:, :, None] & np.asarray(t_mask)[:, None, :]
    # TODO(synk): the ragged C[C_mask] compression is data-dependent; it stays
    # at the host boundary (dense outputs remain on device for pipelines).
    pi = np.asarray(pi_d)[C_mask]
    sigma = np.asarray(sig_d)[C_mask]
    mu = np.asarray(mu_d)[C_mask]
    dist = np.asarray(dist_d)[C_mask][:, None]
    C_batch = np.broadcast_to(np.arange(B)[:, None, None], (B, N_l, N_t))[C_mask]
    return pi, sigma, mu, dist, C_batch, C_mask, dense


# ---------------------------------------------------------------------------
# Pure numpy reference (dense, inference-mode) for validation
# ---------------------------------------------------------------------------
def reference_dense(h_l, h_t, l_pos, t_pos, p):
    h_l = np.asarray(h_l); h_t = np.asarray(h_t)
    l_pos = np.asarray(l_pos); t_pos = np.asarray(t_pos)
    pn = {k: np.asarray(v) for k, v in p.items()}

    def elu(x):
        return np.where(x > 0, x, np.exp(x) - 1.0)

    C = h_l[:, :, None, :] + h_t[:, None, :, :]
    h = C @ pn["w1"] + pn["b1"][0]
    h = h * pn["bn_scale"][0] + pn["bn_shift"][0]
    h = elu(h)
    logit = h @ pn["w_pi"] + pn["b_pi"][0]
    logit = logit - logit.max(-1, keepdims=True)
    e = np.exp(logit)
    pi = e / e.sum(-1, keepdims=True)
    sigma = elu(h @ pn["w_sigma"] + pn["b_sigma"][0]) + 1.1
    mu = elu(h @ pn["w_mu"] + pn["b_mu"][0]) + 1.0

    B, N_l, A, _ = l_pos.shape
    N_t = t_pos.shape[1]
    X = l_pos.reshape(B, N_l * A, 3)
    Y = t_pos.reshape(B, N_t * A, 3)
    d2 = (-2.0 * np.einsum('bik,bjk->bij', X, Y)
          + (Y * Y).sum(-1)[:, None, :]
          + (X * X).sum(-1)[:, :, None])
    with np.errstate(invalid="ignore"):
        d = np.sqrt(d2)
    d = np.where(np.isnan(d), 10000.0, d)
    d = d.reshape(B, N_l, A, N_t, A).min(axis=-1).min(axis=2)
    return pi, sigma, mu, d


if __name__ == "__main__":
    B, N_l, N_t, H, G, A = 2, 8, 16, 32, 8, RES_MAX_NATOMS

    key = jax.random.PRNGKey(0)
    kp, k1, k2, k3, k4 = jax.random.split(key, 5)
    params = init_params(kp, H, G)

    # dense-batched features / positions (to_dense_batch with fill_value=0)
    l_len = np.array([N_l, N_l - 3])
    t_len = np.array([N_t, N_t - 5])
    l_mask = (np.arange(N_l)[None, :] < l_len[:, None])
    t_mask = (np.arange(N_t)[None, :] < t_len[:, None])

    h_l_x = jax.random.normal(k1, (B, N_l, H), jnp.float32) * l_mask[..., None]
    h_t_x = jax.random.normal(k2, (B, N_t, H), jnp.float32) * t_mask[..., None]
    l_pos = (10.0 * jax.random.uniform(k3, (B, N_l, A, 3), jnp.float32)
             * l_mask[..., None, None])
    t_pos = (10.0 * jax.random.uniform(k4, (B, N_t, A, 3), jnp.float32)
             * t_mask[..., None, None])

    pi, sigma, mu, dist, C_batch, C_mask, dense = gm_sv_v2_forward(
        h_l_x, h_t_x, l_mask, t_mask, l_pos, t_pos, params)
    jax.block_until_ready(dense)

    # validate against a pure numpy (f32) reference; MDN matmuls run in bf16
    # on the MXU, so the head tolerances are ~1e-2 level.
    pi_r, sig_r, mu_r, d_r = reference_dense(h_l_x, h_t_x, l_pos, t_pos, params)
    pi_d, sig_d, mu_d, dist_d = [np.asarray(x) for x in dense]
    np.testing.assert_allclose(pi_d, pi_r, rtol=2e-2, atol=1e-2)
    np.testing.assert_allclose(sig_d, sig_r, rtol=2e-2, atol=1e-2)
    np.testing.assert_allclose(mu_d, mu_r, rtol=2e-2, atol=1e-2)
    np.testing.assert_allclose(dist_d, d_r, rtol=1e-3, atol=5e-3)

    M = int(C_mask.sum())
    assert pi.shape == (M, G) and sigma.shape == (M, G) and mu.shape == (M, G)
    assert dist.shape == (M, 1) and C_batch.shape == (M,)

    print("KERNEL_OK")
</pallas_src>

<mosaic_0001>
module attributes {stable_mosaic.version = 11 : i64} {
  func.func @gm_kernel(%arg0: i32, %arg1: memref<1x8x32xf32, #tpu.memory_space<vmem>>, %arg2: memref<1x16x32xf32, #tpu.memory_space<vmem>>, %arg3: memref<32x32xbf16, #tpu.memory_space<vmem>>, %arg4: memref<32x1xf32, #tpu.memory_space<vmem>>, %arg5: memref<24x32xbf16, #tpu.memory_space<vmem>>, %arg6: memref<24x1xf32, #tpu.memory_space<vmem>>, %arg7: memref<1x3x15x128xf32, #tpu.memory_space<vmem>>, %arg8: memref<1x3x15x128xf32, #tpu.memory_space<vmem>>, %arg9: memref<1x24x128xf32, #tpu.memory_space<vmem>>, %arg10: memref<1x1x128xf32, #tpu.memory_space<vmem>>) attributes {dimension_semantics = [#tpu.dimension_semantics<parallel>], iteration_bounds = array<i64: 2>, scalar_prefetch = 0 : i64, scratch_operands = 0 : i64, tpu.core_type = #tpu.core_type<tc>, window_params = [{transform_indices = @transform_0, window_bounds = array<i64: 1, 8, 32>}, {transform_indices = @transform_1, window_bounds = array<i64: 1, 16, 32>}, {pipeline_mode = #tpu.pipeline_mode<synchronous>, transform_indices = @transform_2, window_bounds = array<i64: 32, 32>}, {pipeline_mode = #tpu.pipeline_mode<synchronous>, transform_indices = @transform_3, window_bounds = array<i64: 32, 1>}, {pipeline_mode = #tpu.pipeline_mode<synchronous>, transform_indices = @transform_4, window_bounds = array<i64: 24, 32>}, {pipeline_mode = #tpu.pipeline_mode<synchronous>, transform_indices = @transform_5, window_bounds = array<i64: 24, 1>}, {transform_indices = @transform_6, window_bounds = array<i64: 1, 3, 15, 128>}, {transform_indices = @transform_7, window_bounds = array<i64: 1, 3, 15, 128>}, {transform_indices = @transform_8, window_bounds = array<i64: 1, 24, 128>}, {transform_indices = @transform_9, window_bounds = array<i64: 1, 1, 128>}]} {
    %c0 = arith.constant 0 : index
    %c0_0 = arith.constant 0 : index
    %c0_1 = arith.constant 0 : index
    %0 = vector.load %arg1[%c0, %c0_0, %c0_1] : memref<1x8x32xf32, #tpu.memory_space<vmem>>, vector<1x8x32xf32>
    %1 = vector.shape_cast %0 : vector<1x8x32xf32> to vector<8x32xf32>
    %c0_2 = arith.constant 0 : index
    %c0_3 = arith.constant 0 : index
    %c0_4 = arith.constant 0 : index
    %2 = vector.load %arg2[%c0_2, %c0_3, %c0_4] : memref<1x16x32xf32, #tpu.memory_space<vmem>>, vector<1x16x32xf32>
    %3 = vector.shape_cast %2 : vector<1x16x32xf32> to vector<16x32xf32>
    %4 = vector.shape_cast %1 : vector<8x32xf32> to vector<8x1x32xf32>
    %5 = vector.shape_cast %3 : vector<16x32xf32> to vector<1x16x32xf32>
    %6 = vector.broadcast %4 : vector<8x1x32xf32> to vector<8x16x32xf32>
    %7 = vector.broadcast %5 : vector<1x16x32xf32> to vector<8x16x32xf32>
    %8 = arith.addf %6, %7 : vector<8x16x32xf32>
    %9 = vector.shape_cast %8 : vector<8x16x32xf32> to vector<128x32xf32>
    %10 = tpu.transpose %9, [1, 0] : vector<128x32xf32> -> vector<32x128xf32>
    %11 = arith.truncf %10 : vector<32x128xf32> to vector<32x128xbf16>
    %c0_5 = arith.constant 0 : index
    %c0_6 = arith.constant 0 : index
    %12 = vector.load %arg3[%c0_5, %c0_6] : memref<32x32xbf16, #tpu.memory_space<vmem>>, vector<32x32xbf16>
    %cst = arith.constant dense<0.000000e+00> : vector<32x128xf32>
    %13 = tpu.matmul %12, %11, %cst {dimension_numbers = #tpu.dot_dimension_numbers<[1], [0], [0], [1], [0, 0, 1, 1], [], []>} : vector<32x32xbf16>, vector<32x128xbf16>, vector<32x128xf32> -> vector<32x128xf32>
    %c0_7 = arith.constant 0 : index
    %c0_8 = arith.constant 0 : index
    %14 = vector.load %arg4[%c0_7, %c0_8] : memref<32x1xf32, #tpu.memory_space<vmem>>, vector<32x1xf32>
    %15 = vector.broadcast %14 : vector<32x1xf32> to vector<32x128xf32>
    %16 = arith.addf %13, %15 : vector<32x128xf32>
    %cst_9 = arith.constant 0.000000e+00 : f32
    %17 = vector.broadcast %cst_9 : f32 to vector<32x128xf32>
    %18 = arith.cmpf ogt, %16, %17 : vector<32x128xf32>
    %19 = math.exp %16 : vector<32x128xf32>
    %cst_10 = arith.constant 1.000000e+00 : f32
    %20 = vector.broadcast %cst_10 : f32 to vector<32x128xf32>
    %21 = arith.subf %19, %20 : vector<32x128xf32>
    %22 = arith.select %18, %16, %21 : vector<32x128xi1>, vector<32x128xf32>
    %c0_11 = arith.constant 0 : index
    %c0_12 = arith.constant 0 : index
    %23 = vector.load %arg5[%c0_11, %c0_12] : memref<24x32xbf16, #tpu.memory_space<vmem>>, vector<24x32xbf16>
    %24 = arith.truncf %22 : vector<32x128xf32> to vector<32x128xbf16>
    %cst_13 = arith.constant dense<0.000000e+00> : vector<24x128xf32>
    %25 = tpu.matmul %23, %24, %cst_13 {dimension_numbers = #tpu.dot_dimension_numbers<[1], [0], [0], [1], [0, 0, 1, 1], [], []>} : vector<24x32xbf16>, vector<32x128xbf16>, vector<24x128xf32> -> vector<24x128xf32>
    %c0_14 = arith.constant 0 : index
    %c0_15 = arith.constant 0 : index
    %26 = vector.load %arg6[%c0_14, %c0_15] : memref<24x1xf32, #tpu.memory_space<vmem>>, vector<24x1xf32>
    %27 = vector.broadcast %26 : vector<24x1xf32> to vector<24x128xf32>
    %28 = arith.addf %25, %27 : vector<24x128xf32>
    %29 = vector.extract_strided_slice %28 {offsets = [0, 0], sizes = [8, 128], strides = [1, 1]} : vector<24x128xf32> to vector<8x128xf32>
    %cst_16 = arith.constant dense<0xFF800000> : vector<128xf32>
    %30 = vector.multi_reduction <maximumf>, %29, %cst_16 [0] : vector<8x128xf32> to vector<128xf32>
    %31 = vector.shape_cast %30 : vector<128xf32> to vector<1x128xf32>
    %32 = vector.broadcast %31 : vector<1x128xf32> to vector<8x128xf32>
    %33 = arith.subf %29, %32 : vector<8x128xf32>
    %34 = math.exp %33 : vector<8x128xf32>
    %cst_17 = arith.constant dense<0.000000e+00> : vector<128xf32>
    %35 = vector.multi_reduction <add>, %34, %cst_17 [0] : vector<8x128xf32> to vector<128xf32>
    %36 = vector.shape_cast %35 : vector<128xf32> to vector<1x128xf32>
    %37 = tpu.reciprocal %36 : vector<1x128xf32> -> vector<1x128xf32>
    %38 = vector.broadcast %37 : vector<1x128xf32> to vector<8x128xf32>
    %39 = arith.mulf %34, %38 : vector<8x128xf32>
    %c0_18 = arith.constant 0 : index
    %c0_19 = arith.constant 0 : index
    %c0_20 = arith.constant 0 : index
    %40 = vector.load %arg9[%c0_18, %c0_19, %c0_20] : memref<1x24x128xf32, #tpu.memory_space<vmem>>, vector<1x8x128xf32>
    %41 = vector.shape_cast %40 : vector<1x8x128xf32> to vector<8x128xf32>
    %42 = vector.shape_cast %39 : vector<8x128xf32> to vector<1x8x128xf32>
    tpu.vector_store %arg9[%c0_18, %c0_19, %c0_20], %42 {strides = array<i32>} : memref<1x24x128xf32, #tpu.memory_space<vmem>>, vector<1x8x128xf32>,
    %43 = vector.extract_strided_slice %28 {offsets = [8, 0], sizes = [8, 128], strides = [1, 1]} : vector<24x128xf32> to vector<8x128xf32>
    %cst_21 = arith.constant 0.000000e+00 : f32
    %44 = vector.broadcast %cst_21 : f32 to vector<8x128xf32>
    %45 = arith.cmpf ogt, %43, %44 : vector<8x128xf32>
    %46 = math.exp %43 : vector<8x128xf32>
    %cst_22 = arith.constant 1.000000e+00 : f32
    %47 = vector.broadcast %cst_22 : f32 to vector<8x128xf32>
    %48 = arith.subf %46, %47 : vector<8x128xf32>
    %49 = arith.select %45, %43, %48 : vector<8x128xi1>, vector<8x128xf32>
    %cst_23 = arith.constant 1.100000e+00 : f32
    %50 = vector.broadcast %cst_23 : f32 to vector<8x128xf32>
    %51 = arith.addf %49, %50 : vector<8x128xf32>
    %c0_24 = arith.constant 0 : index
    %c8 = arith.constant 8 : index
    %c0_25 = arith.constant 0 : index
    %52 = vector.load %arg9[%c0_24, %c8, %c0_25] : memref<1x24x128xf32, #tpu.memory_space<vmem>>, vector<1x8x128xf32>
    %53 = vector.shape_cast %52 : vector<1x8x128xf32> to vector<8x128xf32>
    %54 = vector.shape_cast %51 : vector<8x128xf32> to vector<1x8x128xf32>
    tpu.vector_store %arg9[%c0_24, %c8, %c0_25], %54 {strides = array<i32>} : memref<1x24x128xf32, #tpu.memory_space<vmem>>, vector<1x8x128xf32>,
    %55 = vector.extract_strided_slice %28 {offsets = [16, 0], sizes = [8, 128], strides = [1, 1]} : vector<24x128xf32> to vector<8x128xf32>
    %cst_26 = arith.constant 0.000000e+00 : f32
    %56 = vector.broadcast %cst_26 : f32 to vector<8x128xf32>
    %57 = arith.cmpf ogt, %55, %56 : vector<8x128xf32>
    %58 = math.exp %55 : vector<8x128xf32>
    %cst_27 = arith.constant 1.000000e+00 : f32
    %59 = vector.broadcast %cst_27 : f32 to vector<8x128xf32>
    %60 = arith.subf %58, %59 : vector<8x128xf32>
    %61 = arith.select %57, %55, %60 : vector<8x128xi1>, vector<8x128xf32>
    %cst_28 = arith.constant 1.000000e+00 : f32
    %62 = vector.broadcast %cst_28 : f32 to vector<8x128xf32>
    %63 = arith.addf %61, %62 : vector<8x128xf32>
    %c0_29 = arith.constant 0 : index
    %c16 = arith.constant 16 : index
    %c0_30 = arith.constant 0 : index
    %64 = vector.load %arg9[%c0_29, %c16, %c0_30] : memref<1x24x128xf32, #tpu.memory_space<vmem>>, vector<1x8x128xf32>
    %65 = vector.shape_cast %64 : vector<1x8x128xf32> to vector<8x128xf32>
    %66 = vector.shape_cast %63 : vector<8x128xf32> to vector<1x8x128xf32>
    tpu.vector_store %arg9[%c0_29, %c16, %c0_30], %66 {strides = array<i32>} : memref<1x24x128xf32, #tpu.memory_space<vmem>>, vector<1x8x128xf32>,
    %c0_31 = arith.constant 0 : index
    %c0_32 = arith.constant 0 : index
    %c0_33 = arith.constant 0 : index
    %c0_34 = arith.constant 0 : index
    %67 = vector.load %arg7[%c0_31, %c0_32, %c0_33, %c0_34] : memref<1x3x15x128xf32, #tpu.memory_space<vmem>>, vector<1x1x15x128xf32>
    %68 = vector.shape_cast %67 : vector<1x1x15x128xf32> to vector<15x128xf32>
    %c0_35 = arith.constant 0 : index
    %c1 = arith.constant 1 : index
    %c0_36 = arith.constant 0 : index
    %c0_37 = arith.constant 0 : index
    %69 = vector.load %arg7[%c0_35, %c1, %c0_36, %c0_37] : memref<1x3x15x128xf32, #tpu.memory_space<vmem>>, vector<1x1x15x128xf32>
    %70 = vector.shape_cast %69 : vector<1x1x15x128xf32> to vector<15x128xf32>
    %c0_38 = arith.constant 0 : index
    %c2 = arith.constant 2 : index
    %c0_39 = arith.constant 0 : index
    %c0_40 = arith.constant 0 : index
    %71 = vector.load %arg7[%c0_38, %c2, %c0_39, %c0_40] : memref<1x3x15x128xf32, #tpu.memory_space<vmem>>, vector<1x1x15x128xf32>
    %72 = vector.shape_cast %71 : vector<1x1x15x128xf32> to vector<15x128xf32>
    %c0_41 = arith.constant 0 : index
    %c0_42 = arith.constant 0 : index
    %c0_43 = arith.constant 0 : index
    %c0_44 = arith.constant 0 : index
    %73 = vector.load %arg8[%c0_41, %c0_42, %c0_43, %c0_44] : memref<1x3x15x128xf32, #tpu.memory_space<vmem>>, vector<1x1x15x128xf32>
    %74 = vector.shape_cast %73 : vector<1x1x15x128xf32> to vector<15x128xf32>
    %c0_45 = arith.constant 0 : index
    %c1_46 = arith.constant 1 : index
    %c0_47 = arith.constant 0 : index
    %c0_48 = arith.constant 0 : index
    %75 = vector.load %arg8[%c0_45, %c1_46, %c0_47, %c0_48] : memref<1x3x15x128xf32, #tpu.memory_space<vmem>>, vector<1x1x15x128xf32>
    %76 = vector.shape_cast %75 : vector<1x1x15x128xf32> to vector<15x128xf32>
    %c0_49 = arith.constant 0 : index
    %c2_50 = arith.constant 2 : index
    %c0_51 = arith.constant 0 : index
    %c0_52 = arith.constant 0 : index
    %77 = vector.load %arg8[%c0_49, %c2_50, %c0_51, %c0_52] : memref<1x3x15x128xf32, #tpu.memory_space<vmem>>, vector<1x1x15x128xf32>
    %78 = vector.shape_cast %77 : vector<1x1x15x128xf32> to vector<15x128xf32>
    %79 = arith.mulf %68, %68 : vector<15x128xf32>
    %80 = arith.mulf %70, %70 : vector<15x128xf32>
    %81 = arith.addf %79, %80 : vector<15x128xf32>
    %82 = arith.mulf %72, %72 : vector<15x128xf32>
    %83 = arith.addf %81, %82 : vector<15x128xf32>
    %84 = arith.mulf %74, %74 : vector<15x128xf32>
    %85 = arith.mulf %76, %76 : vector<15x128xf32>
    %86 = arith.addf %84, %85 : vector<15x128xf32>
    %87 = arith.mulf %78, %78 : vector<15x128xf32>
    %88 = arith.addf %86, %87 : vector<15x128xf32>
    %cst_53 = arith.constant -2.000000e+00 : f32
    %89 = vector.broadcast %cst_53 : f32 to vector<15x128xf32>
    %90 = arith.mulf %89, %68 : vector<15x128xf32>
    %cst_54 = arith.constant -2.000000e+00 : f32
    %91 = vector.broadcast %cst_54 : f32 to vector<15x128xf32>
    %92 = arith.mulf %91, %70 : vector<15x128xf32>
    %cst_55 = arith.constant -2.000000e+00 : f32
    %93 = vector.broadcast %cst_55 : f32 to vector<15x128xf32>
    %94 = arith.mulf %93, %72 : vector<15x128xf32>
    %cst_56 = arith.constant 1.000000e+08 : f32
    %95 = vector.broadcast %cst_56 : f32 to vector<15x128xf32>
    %96 = vector.extract_strided_slice %74 {offsets = [0, 0], sizes = [1, 128], strides = [1, 1]} : vector<15x128xf32> to vector<1x128xf32>
    %97 = vector.broadcast %96 : vector<1x128xf32> to vector<15x128xf32>
    %98 = arith.mulf %90, %97 : vector<15x128xf32>
    %99 = vector.extract_strided_slice %76 {offsets = [0, 0], sizes = [1, 128], strides = [1, 1]} : vector<15x128xf32> to vector<1x128xf32>
    %100 = vector.broadcast %99 : vector<1x128xf32> to vector<15x128xf32>
    %101 = arith.mulf %92, %100 : vector<15x128xf32>
    %102 = arith.addf %98, %101 : vector<15x128xf32>
    %103 = vector.extract_strided_slice %78 {offsets = [0, 0], sizes = [1, 128], strides = [1, 1]} : vector<15x128xf32> to vector<1x128xf32>
    %104 = vector.broadcast %103 : vector<1x128xf32> to vector<15x128xf32>
    %105 = arith.mulf %94, %104 : vector<15x128xf32>
    %106 = arith.addf %102, %105 : vector<15x128xf32>
    %107 = arith.addf %106, %83 : vector<15x128xf32>
    %108 = vector.extract_strided_slice %88 {offsets = [0, 0], sizes = [1, 128], strides = [1, 1]} : vector<15x128xf32> to vector<1x128xf32>
    %109 = vector.broadcast %108 : vector<1x128xf32> to vector<15x128xf32>
    %110 = arith.addf %107, %109 : vector<15x128xf32>
    %cst_57 = arith.constant 0.000000e+00 : f32
    %111 = vector.broadcast %cst_57 : f32 to vector<15x128xf32>
    %112 = arith.cmpf oge, %110, %111 : vector<15x128xf32>
    %cst_58 = arith.constant 1.000000e+08 : f32
    %113 = vector.broadcast %cst_58 : f32 to vector<15x128xf32>
    %114 = arith.select %112, %110, %113 : vector<15x128xi1>, vector<15x128xf32>
    %115 = arith.minimumf %95, %114 : vector<15x128xf32>
    %116 = vector.extract_strided_slice %74 {offsets = [1, 0], sizes = [1, 128], strides = [1, 1]} : vector<15x128xf32> to vector<1x128xf32>
    %117 = vector.broadcast %116 : vector<1x128xf32> to vector<15x128xf32>
    %118 = arith.mulf %90, %117 : vector<15x128xf32>
    %119 = vector.extract_strided_slice %76 {offsets = [1, 0], sizes = [1, 128], strides = [1, 1]} : vector<15x128xf32> to vector<1x128xf32>
    %120 = vector.broadcast %119 : vector<1x128xf32> to vector<15x128xf32>
    %121 = arith.mulf %92, %120 : vector<15x128xf32>
    %122 = arith.addf %118, %121 : vector<15x128xf32>
    %123 = vector.extract_strided_slice %78 {offsets = [1, 0], sizes = [1, 128], strides = [1, 1]} : vector<15x128xf32> to vector<1x128xf32>
    %124 = vector.broadcast %123 : vector<1x128xf32> to vector<15x128xf32>
    %125 = arith.mulf %94, %124 : vector<15x128xf32>
    %126 = arith.addf %122, %125 : vector<15x128xf32>
    %127 = arith.addf %126, %83 : vector<15x128xf32>
    %128 = vector.extract_strided_slice %88 {offsets = [1, 0], sizes = [1, 128], strides = [1, 1]} : vector<15x128xf32> to vector<1x128xf32>
    %129 = vector.broadcast %128 : vector<1x128xf32> to vector<15x128xf32>
    %130 = arith.addf %127, %129 : vector<15x128xf32>
    %cst_59 = arith.constant 0.000000e+00 : f32
    %131 = vector.broadcast %cst_59 : f32 to vector<15x128xf32>
    %132 = arith.cmpf oge, %130, %131 : vector<15x128xf32>
    %cst_60 = arith.constant 1.000000e+08 : f32
    %133 = vector.broadcast %cst_60 : f32 to vector<15x128xf32>
    %134 = arith.select %132, %130, %133 : vector<15x128xi1>, vector<15x128xf32>
    %135 = arith.minimumf %115, %134 : vector<15x128xf32>
    %136 = vector.extract_strided_slice %74 {offsets = [2, 0], sizes = [1, 128], strides = [1, 1]} : vector<15x128xf32> to vector<1x128xf32>
    %137 = vector.broadcast %136 : vector<1x128xf32> to vector<15x128xf32>
    %138 = arith.mulf %90, %137 : vector<15x128xf32>
    %139 = vector.extract_strided_slice %76 {offsets = [2, 0], sizes = [1, 128], strides = [1, 1]} : vector<15x128xf32> to vector<1x128xf32>
    %140 = vector.broadcast %139 : vector<1x128xf32> to vector<15x128xf32>
    %141 = arith.mulf %92, %140 : vector<15x128xf32>
    %142 = arith.addf %138, %141 : vector<15x128xf32>
    %143 = vector.extract_strided_slice %78 {offsets = [2, 0], sizes = [1, 128], strides = [1, 1]} : vector<15x128xf32> to vector<1x128xf32>
    %144 = vector.broadcast %143 : vector<1x128xf32> to vector<15x128xf32>
    %145 = arith.mulf %94, %144 : vector<15x128xf32>
    %146 = arith.addf %142, %145 : vector<15x128xf32>
    %147 = arith.addf %146, %83 : vector<15x128xf32>
    %148 = vector.extract_strided_slice %88 {offsets = [2, 0], sizes = [1, 128], strides = [1, 1]} : vector<15x128xf32> to vector<1x128xf32>
    %149 = vector.broadcast %148 : vector<1x128xf32> to vector<15x128xf32>
    %150 = arith.addf %147, %149 : vector<15x128xf32>
    %cst_61 = arith.constant 0.000000e+00 : f32
    %151 = vector.broadcast %cst_61 : f32 to vector<15x128xf32>
    %152 = arith.cmpf oge, %150, %151 : vector<15x128xf32>
    %cst_62 = arith.constant 1.000000e+08 : f32
    %153 = vector.broadcast %cst_62 : f32 to vector<15x128xf32>
    %154 = arith.select %152, %150, %153 : vector<15x128xi1>, vector<15x128xf32>
    %155 = arith.minimumf %135, %154 : vector<15x128xf32>
    %156 = vector.extract_strided_slice %74 {offsets = [3, 0], sizes = [1, 128], strides = [1, 1]} : vector<15x128xf32> to vector<1x128xf32>
    %157 = vector.broadcast %156 : vector<1x128xf32> to vector<15x128xf32>
    %158 = arith.mulf %90, %157 : vector<15x128xf32>
    %159 = vector.extract_strided_slice %76 {offsets = [3, 0], sizes = [1, 128], strides = [1, 1]} : vector<15x128xf32> to vector<1x128xf32>
    %160 = vector.broadcast %159 : vector<1x128xf32> to vector<15x128xf32>
    %161 = arith.mulf %92, %160 : vector<15x128xf32>
    %162 = arith.addf %158, %161 : vector<15x128xf32>
    %163 = vector.extract_strided_slice %78 {offsets = [3, 0], sizes = [1, 128], strides = [1, 1]} : vector<15x128xf32> to vector<1x128xf32>
    %164 = vector.broadcast %163 : vector<1x128xf32> to vector<15x128xf32>
    %165 = arith.mulf %94, %164 : vector<15x128xf32>
    %166 = arith.addf %162, %165 : vector<15x128xf32>
    %167 = arith.addf %166, %83 : vector<15x128xf32>
    %168 = vector.extract_strided_slice %88 {offsets = [3, 0], sizes = [1, 128], strides = [1, 1]} : vector<15x128xf32> to vector<1x128xf32>
    %169 = vector.broadcast %168 : vector<1x128xf32> to vector<15x128xf32>
    %170 = arith.addf %167, %169 : vector<15x128xf32>
    %cst_63 = arith.constant 0.000000e+00 : f32
    %171 = vector.broadcast %cst_63 : f32 to vector<15x128xf32>
    %172 = arith.cmpf oge, %170, %171 : vector<15x128xf32>
    %cst_64 = arith.constant 1.000000e+08 : f32
    %173 = vector.broadcast %cst_64 : f32 to vector<15x128xf32>
    %174 = arith.select %172, %170, %173 : vector<15x128xi1>, vector<15x128xf32>
    %175 = arith.minimumf %155, %174 : vector<15x128xf32>
    %176 = vector.extract_strided_slice %74 {offsets = [4, 0], sizes = [1, 128], strides = [1, 1]} : vector<15x128xf32> to vector<1x128xf32>
    %177 = vector.broadcast %176 : vector<1x128xf32> to vector<15x128xf32>
    %178 = arith.mulf %90, %177 : vector<15x128xf32>
    %179 = vector.extract_strided_slice %76 {offsets = [4, 0], sizes = [1, 128], strides = [1, 1]} : vector<15x128xf32> to vector<1x128xf32>
    %180 = vector.broadcast %179 : vector<1x128xf32> to vector<15x128xf32>
    %181 = arith.mulf %92, %180 : vector<15x128xf32>
    %182 = arith.addf %178, %181 : vector<15x128xf32>
    %183 = vector.extract_strided_slice %78 {offsets = [4, 0], sizes = [1, 128], strides = [1, 1]} : vector<15x128xf32> to vector<1x128xf32>
    %184 = vector.broadcast %183 : vector<1x128xf32> to vector<15x128xf32>
    %185 = arith.mulf %94, %184 : vector<15x128xf32>
    %186 = arith.addf %182, %185 : vector<15x128xf32>
    %187 = arith.addf %186, %83 : vector<15x128xf32>
    %188 = vector.extract_strided_slice %88 {offsets = [4, 0], sizes = [1, 128], strides = [1, 1]} : vector<15x128xf32> to vector<1x128xf32>
    %189 = vector.broadcast %188 : vector<1x128xf32> to vector<15x128xf32>
    %190 = arith.addf %187, %189 : vector<15x128xf32>
    %cst_65 = arith.constant 0.000000e+00 : f32
    %191 = vector.broadcast %cst_65 : f32 to vector<15x128xf32>
    %192 = arith.cmpf oge, %190, %191 : vector<15x128xf32>
    %cst_66 = arith.constant 1.000000e+08 : f32
    %193 = vector.broadcast %cst_66 : f32 to vector<15x128xf32>
    %194 = arith.select %192, %190, %193 : vector<15x128xi1>, vector<15x128xf32>
    %195 = arith.minimumf %175, %194 : vector<15x128xf32>
    %196 = vector.extract_strided_slice %74 {offsets = [5, 0], sizes = [1, 128], strides = [1, 1]} : vector<15x128xf32> to vector<1x128xf32>
    %197 = vector.broadcast %196 : vector<1x128xf32> to vector<15x128xf32>
    %198 = arith.mulf %90, %197 : vector<15x128xf32>
    %199 = vector.extract_strided_slice %76 {offsets = [5, 0], sizes = [1, 128], strides = [1, 1]} : vector<15x128xf32> to vector<1x128xf32>
    %200 = vector.broadcast %199 : vector<1x128xf32> to vector<15x128xf32>
    %201 = arith.mulf %92, %200 : vector<15x128xf32>
    %202 = arith.addf %198, %201 : vector<15x128xf32>
    %203 = vector.extract_strided_slice %78 {offsets = [5, 0], sizes = [1, 128], strides = [1, 1]} : vector<15x128xf32> to vector<1x128xf32>
    %204 = vector.broadcast %203 : vector<1x128xf32> to vector<15x128xf32>
    %205 = arith.mulf %94, %204 : vector<15x128xf32>
    %206 = arith.addf %202, %205 : vector<15x128xf32>
    %207 = arith.addf %206, %83 : vector<15x128xf32>
    %208 = vector.extract_strided_slice %88 {offsets = [5, 0], sizes = [1, 128], strides = [1, 1]} : vector<15x128xf32> to vector<1x128xf32>
    %209 = vector.broadcast %208 : vector<1x128xf32> to vector<15x128xf32>
    %210 = arith.addf %207, %209 : vector<15x128xf32>
    %cst_67 = arith.constant 0.000000e+00 : f32
    %211 = vector.broadcast %cst_67 : f32 to vector<15x128xf32>
    %212 = arith.cmpf oge, %210, %211 : vector<15x128xf32>
    %cst_68 = arith.constant 1.000000e+08 : f32
    %213 = vector.broadcast %cst_68 : f32 to vector<15x128xf32>
    %214 = arith.select %212, %210, %213 : vector<15x128xi1>, vector<15x128xf32>
    %215 = arith.minimumf %195, %214 : vector<15x128xf32>
    %216 = vector.extract_strided_slice %74 {offsets = [6, 0], sizes = [1, 128], strides = [1, 1]} : vector<15x128xf32> to vector<1x128xf32>
    %217 = vector.broadcast %216 : vector<1x128xf32> to vector<15x128xf32>
    %218 = arith.mulf %90, %217 : vector<15x128xf32>
    %219 = vector.extract_strided_slice %76 {offsets = [6, 0], sizes = [1, 128], strides = [1, 1]} : vector<15x128xf32> to vector<1x128xf32>
    %220 = vector.broadcast %219 : vector<1x128xf32> to vector<15x128xf32>
    %221 = arith.mulf %92, %220 : vector<15x128xf32>
    %222 = arith.addf %218, %221 : vector<15x128xf32>
    %223 = vector.extract_strided_slice %78 {offsets = [6, 0], sizes = [1, 128], strides = [1, 1]} : vector<15x128xf32> to vector<1x128xf32>
    %224 = vector.broadcast %223 : vector<1x128xf32> to vector<15x128xf32>
    %225 = arith.mulf %94, %224 : vector<15x128xf32>
    %226 = arith.addf %222, %225 : vector<15x128xf32>
    %227 = arith.addf %226, %83 : vector<15x128xf32>
    %228 = vector.extract_strided_slice %88 {offsets = [6, 0], sizes = [1, 128], strides = [1, 1]} : vector<15x128xf32> to vector<1x128xf32>
    %229 = vector.broadcast %228 : vector<1x128xf32> to vector<15x128xf32>
    %230 = arith.addf %227, %229 : vector<15x128xf32>
    %cst_69 = arith.constant 0.000000e+00 : f32
    %231 = vector.broadcast %cst_69 : f32 to vector<15x128xf32>
    %232 = arith.cmpf oge, %230, %231 : vector<15x128xf32>
    %cst_70 = arith.constant 1.000000e+08 : f32
    %233 = vector.broadcast %cst_70 : f32 to vector<15x128xf32>
    %234 = arith.select %232, %230, %233 : vector<15x128xi1>, vector<15x128xf32>
    %235 = arith.minimumf %215, %234 : vector<15x128xf32>
    %236 = vector.extract_strided_slice %74 {offsets = [7, 0], sizes = [1, 128], strides = [1, 1]} : vector<15x128xf32> to vector<1x128xf32>
    %237 = vector.broadcast %236 : vector<1x128xf32> to vector<15x128xf32>
    %238 = arith.mulf %90, %237 : vector<15x128xf32>
    %239 = vector.extract_strided_slice %76 {offsets = [7, 0], sizes = [1, 128], strides = [1, 1]} : vector<15x128xf32> to vector<1x128xf32>
    %240 = vector.broadcast %239 : vector<1x128xf32> to vector<15x128xf32>
    %241 = arith.mulf %92, %240 : vector<15x128xf32>
    %242 = arith.addf %238, %241 : vector<15x128xf32>
    %243 = vector.extract_strided_slice %78 {offsets = [7, 0], sizes = [1, 128], strides = [1, 1]} : vector<15x128xf32> to vector<1x128xf32>
    %244 = vector.broadcast %243 : vector<1x128xf32> to vector<15x128xf32>
    %245 = arith.mulf %94, %244 : vector<15x128xf32>
    %246 = arith.addf %242, %245 : vector<15x128xf32>
    %247 = arith.addf %246, %83 : vector<15x128xf32>
    %248 = vector.extract_strided_slice %88 {offsets = [7, 0], sizes = [1, 128], strides = [1, 1]} : vector<15x128xf32> to vector<1x128xf32>
    %249 = vector.broadcast %248 : vector<1x128xf32> to vector<15x128xf32>
    %250 = arith.addf %247, %249 : vector<15x128xf32>
    %cst_71 = arith.constant 0.000000e+00 : f32
    %251 = vector.broadcast %cst_71 : f32 to vector<15x128xf32>
    %252 = arith.cmpf oge, %250, %251 : vector<15x128xf32>
    %cst_72 = arith.constant 1.000000e+08 : f32
    %253 = vector.broadcast %cst_72 : f32 to vector<15x128xf32>
    %254 = arith.select %252, %250, %253 : vector<15x128xi1>, vector<15x128xf32>
    %255 = arith.minimumf %235, %254 : vector<15x128xf32>
    %256 = vector.extract_strided_slice %74 {offsets = [8, 0], sizes = [1, 128], strides = [1, 1]} : vector<15x128xf32> to vector<1x128xf32>
    %257 = vector.broadcast %256 : vector<1x128xf32> to vector<15x128xf32>
    %258 = arith.mulf %90, %257 : vector<15x128xf32>
    %259 = vector.extract_strided_slice %76 {offsets = [8, 0], sizes = [1, 128], strides = [1, 1]} : vector<15x128xf32> to vector<1x128xf32>
    %260 = vector.broadcast %259 : vector<1x128xf32> to vector<15x128xf32>
    %261 = arith.mulf %92, %260 : vector<15x128xf32>
    %262 = arith.addf %258, %261 : vector<15x128xf32>
    %263 = vector.extract_strided_slice %78 {offsets = [8, 0], sizes = [1, 128], strides = [1, 1]} : vector<15x128xf32> to vector<1x128xf32>
    %264 = vector.broadcast %263 : vector<1x128xf32> to vector<15x128xf32>
    %265 = arith.mulf %94, %264 : vector<15x128xf32>
    %266 = arith.addf %262, %265 : vector<15x128xf32>
    %267 = arith.addf %266, %83 : vector<15x128xf32>
    %268 = vector.extract_strided_slice %88 {offsets = [8, 0], sizes = [1, 128], strides = [1, 1]} : vector<15x128xf32> to vector<1x128xf32>
    %269 = vector.broadcast %268 : vector<1x128xf32> to vector<15x128xf32>
    %270 = arith.addf %267, %269 : vector<15x128xf32>
    %cst_73 = arith.constant 0.000000e+00 : f32
    %271 = vector.broadcast %cst_73 : f32 to vector<15x128xf32>
    %272 = arith.cmpf oge, %270, %271 : vector<15x128xf32>
    %cst_74 = arith.constant 1.000000e+08 : f32
    %273 = vector.broadcast %cst_74 : f32 to vector<15x128xf32>
    %274 = arith.select %272, %270, %273 : vector<15x128xi1>, vector<15x128xf32>
    %275 = arith.minimumf %255, %274 : vector<15x128xf32>
    %276 = vector.extract_strided_slice %74 {offsets = [9, 0], sizes = [1, 128], strides = [1, 1]} : vector<15x128xf32> to vector<1x128xf32>
    %277 = vector.broadcast %276 : vector<1x128xf32> to vector<15x128xf32>
    %278 = arith.mulf %90, %277 : vector<15x128xf32>
    %279 = vector.extract_strided_slice %76 {offsets = [9, 0], sizes = [1, 128], strides = [1, 1]} : vector<15x128xf32> to vector<1x128xf32>
    %280 = vector.broadcast %279 : vector<1x128xf32> to vector<15x128xf32>
    %281 = arith.mulf %92, %280 : vector<15x128xf32>
    %282 = arith.addf %278, %281 : vector<15x128xf32>
    %283 = vector.extract_strided_slice %78 {offsets = [9, 0], sizes = [1, 128], strides = [1, 1]} : vector<15x128xf32> to vector<1x128xf32>
    %284 = vector.broadcast %283 : vector<1x128xf32> to vector<15x128xf32>
    %285 = arith.mulf %94, %284 : vector<15x128xf32>
    %286 = arith.addf %282, %285 : vector<15x128xf32>
    %287 = arith.addf %286, %83 : vector<15x128xf32>
    %288 = vector.extract_strided_slice %88 {offsets = [9, 0], sizes = [1, 128], strides = [1, 1]} : vector<15x128xf32> to vector<1x128xf32>
    %289 = vector.broadcast %288 : vector<1x128xf32> to vector<15x128xf32>
    %290 = arith.addf %287, %289 : vector<15x128xf32>
    %cst_75 = arith.constant 0.000000e+00 : f32
    %291 = vector.broadcast %cst_75 : f32 to vector<15x128xf32>
    %292 = arith.cmpf oge, %290, %291 : vector<15x128xf32>
    %cst_76 = arith.constant 1.000000e+08 : f32
    %293 = vector.broadcast %cst_76 : f32 to vector<15x128xf32>
    %294 = arith.select %292, %290, %293 : vector<15x128xi1>, vector<15x128xf32>
    %295 = arith.minimumf %275, %294 : vector<15x128xf32>
    %296 = vector.extract_strided_slice %74 {offsets = [10, 0], sizes = [1, 128], strides = [1, 1]} : vector<15x128xf32> to vector<1x128xf32>
    %297 = vector.broadcast %296 : vector<1x128xf32> to vector<15x128xf32>
    %298 = arith.mulf %90, %297 : vector<15x128xf32>
    %299 = vector.extract_strided_slice %76 {offsets = [10, 0], sizes = [1, 128], strides = [1, 1]} : vector<15x128xf32> to vector<1x128xf32>
    %300 = vector.broadcast %299 : vector<1x128xf32> to vector<15x128xf32>
    %301 = arith.mulf %92, %300 : vector<15x128xf32>
    %302 = arith.addf %298, %301 : vector<15x128xf32>
    %303 = vector.extract_strided_slice %78 {offsets = [10, 0], sizes = [1, 128], strides = [1, 1]} : vector<15x128xf32> to vector<1x128xf32>
    %304 = vector.broadcast %303 : vector<1x128xf32> to vector<15x128xf32>
    %305 = arith.mulf %94, %304 : vector<15x128xf32>
    %306 = arith.addf %302, %305 : vector<15x128xf32>
    %307 = arith.addf %306, %83 : vector<15x128xf32>
    %308 = vector.extract_strided_slice %88 {offsets = [10, 0], sizes = [1, 128], strides = [1, 1]} : vector<15x128xf32> to vector<1x128xf32>
    %309 = vector.broadcast %308 : vector<1x128xf32> to vector<15x128xf32>
    %310 = arith.addf %307, %309 : vector<15x128xf32>
    %cst_77 = arith.constant 0.000000e+00 : f32
    %311 = vector.broadcast %cst_77 : f32 to vector<15x128xf32>
    %312 = arith.cmpf oge, %310, %311 : vector<15x128xf32>
    %cst_78 = arith.constant 1.000000e+08 : f32
    %313 = vector.broadcast %cst_78 : f32 to vector<15x128xf32>
    %314 = arith.select %312, %310, %313 : vector<15x128xi1>, vector<15x128xf32>
    %315 = arith.minimumf %295, %314 : vector<15x128xf32>
    %316 = vector.extract_strided_slice %74 {offsets = [11, 0], sizes = [1, 128], strides = [1, 1]} : vector<15x128xf32> to vector<1x128xf32>
    %317 = vector.broadcast %316 : vector<1x128xf32> to vector<15x128xf32>
    %318 = arith.mulf %90, %317 : vector<15x128xf32>
    %319 = vector.extract_strided_slice %76 {offsets = [11, 0], sizes = [1, 128], strides = [1, 1]} : vector<15x128xf32> to vector<1x128xf32>
    %320 = vector.broadcast %319 : vector<1x128xf32> to vector<15x128xf32>
    %321 = arith.mulf %92, %320 : vector<15x128xf32>
    %322 = arith.addf %318, %321 : vector<15x128xf32>
    %323 = vector.extract_strided_slice %78 {offsets = [11, 0], sizes = [1, 128], strides = [1, 1]} : vector<15x128xf32> to vector<1x128xf32>
    %324 = vector.broadcast %323 : vector<1x128xf32> to vector<15x128xf32>
    %325 = arith.mulf %94, %324 : vector<15x128xf32>
    %326 = arith.addf %322, %325 : vector<15x128xf32>
    %327 = arith.addf %326, %83 : vector<15x128xf32>
    %328 = vector.extract_strided_slice %88 {offsets = [11, 0], sizes = [1, 128], strides = [1, 1]} : vector<15x128xf32> to vector<1x128xf32>
    %329 = vector.broadcast %328 : vector<1x128xf32> to vector<15x128xf32>
    %330 = arith.addf %327, %329 : vector<15x128xf32>
    %cst_79 = arith.constant 0.000000e+00 : f32
    %331 = vector.broadcast %cst_79 : f32 to vector<15x128xf32>
    %332 = arith.cmpf oge, %330, %331 : vector<15x128xf32>
    %cst_80 = arith.constant 1.000000e+08 : f32
    %333 = vector.broadcast %cst_80 : f32 to vector<15x128xf32>
    %334 = arith.select %332, %330, %333 : vector<15x128xi1>, vector<15x128xf32>
    %335 = arith.minimumf %315, %334 : vector<15x128xf32>
    %336 = vector.extract_strided_slice %74 {offsets = [12, 0], sizes = [1, 128], strides = [1, 1]} : vector<15x128xf32> to vector<1x128xf32>
    %337 = vector.broadcast %336 : vector<1x128xf32> to vector<15x128xf32>
    %338 = arith.mulf %90, %337 : vector<15x128xf32>
    %339 = vector.extract_strided_slice %76 {offsets = [12, 0], sizes = [1, 128], strides = [1, 1]} : vector<15x128xf32> to vector<1x128xf32>
    %340 = vector.broadcast %339 : vector<1x128xf32> to vector<15x128xf32>
    %341 = arith.mulf %92, %340 : vector<15x128xf32>
    %342 = arith.addf %338, %341 : vector<15x128xf32>
    %343 = vector.extract_strided_slice %78 {offsets = [12, 0], sizes = [1, 128], strides = [1, 1]} : vector<15x128xf32> to vector<1x128xf32>
    %344 = vector.broadcast %343 : vector<1x128xf32> to vector<15x128xf32>
    %345 = arith.mulf %94, %344 : vector<15x128xf32>
    %346 = arith.addf %342, %345 : vector<15x128xf32>
    %347 = arith.addf %346, %83 : vector<15x128xf32>
    %348 = vector.extract_strided_slice %88 {offsets = [12, 0], sizes = [1, 128], strides = [1, 1]} : vector<15x128xf32> to vector<1x128xf32>
    %349 = vector.broadcast %348 : vector<1x128xf32> to vector<15x128xf32>
    %350 = arith.addf %347, %349 : vector<15x128xf32>
    %cst_81 = arith.constant 0.000000e+00 : f32
    %351 = vector.broadcast %cst_81 : f32 to vector<15x128xf32>
    %352 = arith.cmpf oge, %350, %351 : vector<15x128xf32>
    %cst_82 = arith.constant 1.000000e+08 : f32
    %353 = vector.broadcast %cst_82 : f32 to vector<15x128xf32>
    %354 = arith.select %352, %350, %353 : vector<15x128xi1>, vector<15x128xf32>
    %355 = arith.minimumf %335, %354 : vector<15x128xf32>
    %356 = vector.extract_strided_slice %74 {offsets = [13, 0], sizes = [1, 128], strides = [1, 1]} : vector<15x128xf32> to vector<1x128xf32>
    %357 = vector.broadcast %356 : vector<1x128xf32> to vector<15x128xf32>
    %358 = arith.mulf %90, %357 : vector<15x128xf32>
    %359 = vector.extract_strided_slice %76 {offsets = [13, 0], sizes = [1, 128], strides = [1, 1]} : vector<15x128xf32> to vector<1x128xf32>
    %360 = vector.broadcast %359 : vector<1x128xf32> to vector<15x128xf32>
    %361 = arith.mulf %92, %360 : vector<15x128xf32>
    %362 = arith.addf %358, %361 : vector<15x128xf32>
    %363 = vector.extract_strided_slice %78 {offsets = [13, 0], sizes = [1, 128], strides = [1, 1]} : vector<15x128xf32> to vector<1x128xf32>
    %364 = vector.broadcast %363 : vector<1x128xf32> to vector<15x128xf32>
    %365 = arith.mulf %94, %364 : vector<15x128xf32>
    %366 = arith.addf %362, %365 : vector<15x128xf32>
    %367 = arith.addf %366, %83 : vector<15x128xf32>
    %368 = vector.extract_strided_slice %88 {offsets = [13, 0], sizes = [1, 128], strides = [1, 1]} : vector<15x128xf32> to vector<1x128xf32>
    %369 = vector.broadcast %368 : vector<1x128xf32> to vector<15x128xf32>
    %370 = arith.addf %367, %369 : vector<15x128xf32>
    %cst_83 = arith.constant 0.000000e+00 : f32
    %371 = vector.broadcast %cst_83 : f32 to vector<15x128xf32>
    %372 = arith.cmpf oge, %370, %371 : vector<15x128xf32>
    %cst_84 = arith.constant 1.000000e+08 : f32
    %373 = vector.broadcast %cst_84 : f32 to vector<15x128xf32>
    %374 = arith.select %372, %370, %373 : vector<15x128xi1>, vector<15x128xf32>
    %375 = arith.minimumf %355, %374 : vector<15x128xf32>
    %376 = vector.extract_strided_slice %74 {offsets = [14, 0], sizes = [1, 128], strides = [1, 1]} : vector<15x128xf32> to vector<1x128xf32>
    %377 = vector.broadcast %376 : vector<1x128xf32> to vector<15x128xf32>
    %378 = arith.mulf %90, %377 : vector<15x128xf32>
    %379 = vector.extract_strided_slice %76 {offsets = [14, 0], sizes = [1, 128], strides = [1, 1]} : vector<15x128xf32> to vector<1x128xf32>
    %380 = vector.broadcast %379 : vector<1x128xf32> to vector<15x128xf32>
    %381 = arith.mulf %92, %380 : vector<15x128xf32>
    %382 = arith.addf %378, %381 : vector<15x128xf32>
    %383 = vector.extract_strided_slice %78 {offsets = [14, 0], sizes = [1, 128], strides = [1, 1]} : vector<15x128xf32> to vector<1x128xf32>
    %384 = vector.broadcast %383 : vector<1x128xf32> to vector<15x128xf32>
    %385 = arith.mulf %94, %384 : vector<15x128xf32>
    %386 = arith.addf %382, %385 : vector<15x128xf32>
    %387 = arith.addf %386, %83 : vector<15x128xf32>
    %388 = vector.extract_strided_slice %88 {offsets = [14, 0], sizes = [1, 128], strides = [1, 1]} : vector<15x128xf32> to vector<1x128xf32>
    %389 = vector.broadcast %388 : vector<1x128xf32> to vector<15x128xf32>
    %390 = arith.addf %387, %389 : vector<15x128xf32>
    %cst_85 = arith.constant 0.000000e+00 : f32
    %391 = vector.broadcast %cst_85 : f32 to vector<15x128xf32>
    %392 = arith.cmpf oge, %390, %391 : vector<15x128xf32>
    %cst_86 = arith.constant 1.000000e+08 : f32
    %393 = vector.broadcast %cst_86 : f32 to vector<15x128xf32>
    %394 = arith.select %392, %390, %393 : vector<15x128xi1>, vector<15x128xf32>
    %395 = arith.minimumf %375, %394 : vector<15x128xf32>
    %cst_87 = arith.constant dense<0x7F800000> : vector<128xf32>
    %396 = vector.multi_reduction <minimumf>, %395, %cst_87 [0] : vector<15x128xf32> to vector<128xf32>
    %397 = vector.shape_cast %396 : vector<128xf32> to vector<1x128xf32>
    %398 = math.sqrt %397 : vector<1x128xf32>
    %c0_88 = arith.constant 0 : index
    %c0_89 = arith.constant 0 : index
    %c0_90 = arith.constant 0 : index
    %399 = vector.load %arg10[%c0_88, %c0_89, %c0_90] : memref<1x1x128xf32, #tpu.memory_space<vmem>>, vector<1x1x128xf32>
    %400 = vector.shape_cast %399 : vector<1x1x128xf32> to vector<1x128xf32>
    %401 = vector.shape_cast %398 : vector<1x128xf32> to vector<1x1x128xf32>
    tpu.vector_store %arg10[%c0_88, %c0_89, %c0_90], %401 {strides = array<i32>} : memref<1x1x128xf32, #tpu.memory_space<vmem>>, vector<1x1x128xf32>,
    return
  }
  func.func @transform_0(%arg0: i32) -> (i32, i32, i32) {
    %c0_i32 = arith.constant 0 : i32
    %c0_i32_0 = arith.constant 0 : i32
    %c0_i32_1 = arith.constant 0 : i32
    return %arg0, %c0_i32, %c0_i32_0 : i32, i32, i32
  }
  func.func @transform_1(%arg0: i32) -> (i32, i32, i32) {
    %c0_i32 = arith.constant 0 : i32
    %c0_i32_0 = arith.constant 0 : i32
    %c0_i32_1 = arith.constant 0 : i32
    return %arg0, %c0_i32, %c0_i32_0 : i32, i32, i32
  }
  func.func @transform_2(%arg0: i32) -> (i32, i32) {
    %c0_i32 = arith.constant 0 : i32
    %c0_i32_0 = arith.constant 0 : i32
    %c0_i32_1 = arith.constant 0 : i32
    return %c0_i32, %c0_i32_0 : i32, i32
  }
  func.func @transform_3(%arg0: i32) -> (i32, i32) {
    %c0_i32 = arith.constant 0 : i32
    %c0_i32_0 = arith.constant 0 : i32
    %c0_i32_1 = arith.constant 0 : i32
    return %c0_i32, %c0_i32_0 : i32, i32
  }
  func.func @transform_4(%arg0: i32) -> (i32, i32) {
    %c0_i32 = arith.constant 0 : i32
    %c0_i32_0 = arith.constant 0 : i32
    %c0_i32_1 = arith.constant 0 : i32
    return %c0_i32, %c0_i32_0 : i32, i32
  }
  func.func @transform_5(%arg0: i32) -> (i32, i32) {
    %c0_i32 = arith.constant 0 : i32
    %c0_i32_0 = arith.constant 0 : i32
    %c0_i32_1 = arith.constant 0 : i32
    return %c0_i32, %c0_i32_0 : i32, i32
  }
  func.func @transform_6(%arg0: i32) -> (i32, i32, i32, i32) {
    %c0_i32 = arith.constant 0 : i32
    %c0_i32_0 = arith.constant 0 : i32
    %c0_i32_1 = arith.constant 0 : i32
    %c0_i32_2 = arith.constant 0 : i32
    return %arg0, %c0_i32, %c0_i32_0, %c0_i32_1 : i32, i32, i32, i32
  }
  func.func @transform_7(%arg0: i32) -> (i32, i32, i32, i32) {
    %c0_i32 = arith.constant 0 : i32
    %c0_i32_0 = arith.constant 0 : i32
    %c0_i32_1 = arith.constant 0 : i32
    %c0_i32_2 = arith.constant 0 : i32
    return %arg0, %c0_i32, %c0_i32_0, %c0_i32_1 : i32, i32, i32, i32
  }
  func.func @transform_8(%arg0: i32) -> (i32, i32, i32) {
    %c0_i32 = arith.constant 0 : i32
    %c0_i32_0 = arith.constant 0 : i32
    %c0_i32_1 = arith.constant 0 : i32
    return %arg0, %c0_i32, %c0_i32_0 : i32, i32, i32
  }
  func.func @transform_9(%arg0: i32) -> (i32, i32, i32) {
    %c0_i32 = arith.constant 0 : i32
    %c0_i32_0 = arith.constant 0 : i32
    %c0_i32_1 = arith.constant 0 : i32
    return %arg0, %c0_i32, %c0_i32_0 : i32, i32, i32
  }
}

</mosaic_0001>

<llo_original>
// kernel: gm_sv_v2_dense.1
$region0: #{gm_sv_v2_dense.1}
  #allocation0 [shape = 'u32[]', space=smem, size = 0x4, offset = 0x4, fixed_abs, tag = 'smem constant byte address 0x4 - core index']
  #allocation1 [shape = 'u32[72,128]{1,0:T(1,128)}', space=vmem, size = 0x9000, scoped, tag = 'internal scratch']
  %s0 = inlined_call_operand.vmem [shape: f32[2,8,32], index: 0, kind: input, shape index: {}]
  %s1 = inlined_call_operand.vmem [shape: f32[2,16,32], index: 1, kind: input, shape index: {}]
  %s2 = inlined_call_operand.vmem [shape: bf16[32,32], index: 2, kind: input, shape index: {}]
  %s3 = inlined_call_operand.vmem [shape: f32[32,1], index: 3, kind: input, shape index: {}]
  %s4 = inlined_call_operand.vmem [shape: bf16[24,32], index: 4, kind: input, shape index: {}]
  %s5 = inlined_call_operand.vmem [shape: f32[24,1], index: 5, kind: input, shape index: {}]
  %s6 = inlined_call_operand.vmem [shape: f32[2,3,15,128], index: 6, kind: input, shape index: {}]
  %s7 = inlined_call_operand.vmem [shape: f32[2,3,15,128], index: 7, kind: input, shape index: {}]
  %s8 = inlined_call_operand.vmem [shape: f32[2,24,128], index: 8, kind: output, shape index: {0}]
  %s9 = inlined_call_operand.vmem [shape: f32[2,1,128], index: 9, kind: output, shape index: {1}]
  %10 = xla_tuple %s8, %s9
  %s11 = sld [smem:[#allocation0]]
  $region73: #{gm_sv_v2_dense.1} parent=0
    _
  %s13 = ssub.s32 1, %s11
  %s14 = scalar_select 0, %s13, %s11
  loop: start=0, step=1, limit=4
  $region2: #{gm_sv_v2_dense.1} parent=0 // loop_pre_header
    _
  $region3: #{gm_sv_v2_dense.1} parent=0 // loop_header
    %s16 = sphi 0, %s20
    %p17 = scmp.ge.s32.totalorder %s16, 4
    %s26 = sphi 0, %s28
    %s29 = sphi 0, %s26
    %s30 = sphi 0, %s29
    %s46 = sphi 0, %s30
    %s52 = sphi 0, %s54
    %s55 = sphi 0, %s52
    %s56 = sphi 0, %s55
    %s72 = sphi 0, %s56
    %s76 = sphi 0, %s76
    %s78 = sphi 0, %s76
    %s79 = sphi 0, %s78
    %s93 = sphi 0, %s79
    %s97 = sphi 0, %s97
    %s99 = sphi 0, %s97
    %s100 = sphi 0, %s99
    %s114 = sphi 0, %s100
    %s118 = sphi 0, %s118
    %s120 = sphi 0, %s118
    %s121 = sphi 0, %s120
    %s135 = sphi 0, %s121
    %s139 = sphi 0, %s139
    %s141 = sphi 0, %s139
    %s142 = sphi 0, %s141
    %s156 = sphi 0, %s142
    %s162 = sphi 0, %s164
    %s165 = sphi 0, %s162
    %s166 = sphi 0, %s165
    %s182 = sphi 0, %s166
    %s188 = sphi 0, %s190
    %s191 = sphi 0, %s188
    %s192 = sphi 0, %s191
    %s208 = sphi 0, %s192
    %s214 = sphi 0, %s216
    %s217 = sphi 0, %s214
    %s218 = sphi 0, %s217
    %s234 = sphi 0, %s218
    %s240 = sphi 0, %s242
    %s243 = sphi 0, %s240
    %s244 = sphi 0, %s243
    %s260 = sphi 0, %s244
  $region4: #{gm_sv_v2_dense.1} parent=0 // loop_header_branch
    %19 = sbr.rel (%p17) target = $region8
  $region5: #{gm_sv_v2_dense.1} parent=0 // loop_body
    %s21 = ssub.s32 %s16, 1
    %s22 = ssub.s32 %s16, 2
    %s23 = sadd.s32 %s16, 1
    %s24 = ssub.s32 %s16, %s23
    %p25 = scmp.eq.s32.totalorder %s24, 0
    %s27 = sadd.s32 %s26, 1
    %s28 = scalar_select %p25, %s26, %s27
    %p31 = pneg %p25
    %p32 = scmp.eq.s32.totalorder %s16, 1
    %p33 = por %p31, %p32
    %p34 = scmp.ne.s32.totalorder %s26, %s29
    %p35 = scmp.eq.s32.totalorder %s16, 0
    %p36 = por %p34, %p35
    %p37 = scmp.ne.s32.totalorder %s26, %s29
    %p38 = scmp.eq.s32.totalorder %s21, 1
    %p39 = por %p37, %p38
    %p40 = scmp.ne.s32.totalorder %s29, %s30
    %p41 = scmp.eq.s32.totalorder %s21, 0
    %p42 = por %p40, %p41
    %p43 = scmp.ne.s32.totalorder %s29, %s30
    %p44 = scmp.eq.s32.totalorder %s22, 1
    %p45 = por %p43, %p44
    %p47 = scmp.ne.s32.totalorder %s30, %s46
    %p48 = scmp.eq.s32.totalorder %s22, 0
    %p49 = por %p47, %p48
    %s50 = ssub.s32 %s16, %s23
    %p51 = scmp.eq.s32.totalorder %s50, 0
    %s53 = sadd.s32 %s52, 1
    %s54 = scalar_select %p51, %s52, %s53
    %p57 = pneg %p51
    %p58 = scmp.eq.s32.totalorder %s16, 1
    %p59 = por %p57, %p58
    %p60 = scmp.ne.s32.totalorder %s52, %s55
    %p61 = scmp.eq.s32.totalorder %s16, 0
    %p62 = por %p60, %p61
    %p63 = scmp.ne.s32.totalorder %s52, %s55
    %p64 = scmp.eq.s32.totalorder %s21, 1
    %p65 = por %p63, %p64
    %p66 = scmp.ne.s32.totalorder %s55, %s56
    %p67 = scmp.eq.s32.totalorder %s21, 0
    %p68 = por %p66, %p67
    %p69 = scmp.ne.s32.totalorder %s55, %s56
    %p70 = scmp.eq.s32.totalorder %s22, 1
    %p71 = por %p69, %p70
    %p73 = scmp.ne.s32.totalorder %s56, %s72
    %p74 = scmp.eq.s32.totalorder %s22, 0
    %p75 = por %p73, %p74
    %s77 = sadd.s32 %s76, 1
    %p80 = scmp.eq.s32.totalorder %s16, 1
    %p81 = scmp.ne.s32.totalorder %s76, %s78
    %p82 = scmp.eq.s32.totalorder %s16, 0
    %p83 = por %p81, %p82
    %p84 = scmp.ne.s32.totalorder %s76, %s78
    %p85 = scmp.eq.s32.totalorder %s21, 1
    %p86 = por %p84, %p85
    %p87 = scmp.ne.s32.totalorder %s78, %s79
    %p88 = scmp.eq.s32.totalorder %s21, 0
    %p89 = por %p87, %p88
    %p90 = scmp.ne.s32.totalorder %s78, %s79
    %p91 = scmp.eq.s32.totalorder %s22, 1
    %p92 = por %p90, %p91
    %p94 = scmp.ne.s32.totalorder %s79, %s93
    %p95 = scmp.eq.s32.totalorder %s22, 0
    %p96 = por %p94, %p95
    %s98 = sadd.s32 %s97, 1
    %p101 = scmp.eq.s32.totalorder %s16, 1
    %p102 = scmp.ne.s32.totalorder %s97, %s99
    %p103 = scmp.eq.s32.totalorder %s16, 0
    %p104 = por %p102, %p103
    %p105 = scmp.ne.s32.totalorder %s97, %s99
    %p106 = scmp.eq.s32.totalorder %s21, 1
    %p107 = por %p105, %p106
    %p108 = scmp.ne.s32.totalorder %s99, %s100
    %p109 = scmp.eq.s32.totalorder %s21, 0
    %p110 = por %p108, %p109
    %p111 = scmp.ne.s32.totalorder %s99, %s100
    %p112 = scmp.eq.s32.totalorder %s22, 1
    %p113 = por %p111, %p112
    %p115 = scmp.ne.s32.totalorder %s100, %s114
    %p116 = scmp.eq.s32.totalorder %s22, 0
    %p117 = por %p115, %p116
    %s119 = sadd.s32 %s118, 1
    %p122 = scmp.eq.s32.totalorder %s16, 1
    %p123 = scmp.ne.s32.totalorder %s118, %s120
    %p124 = scmp.eq.s32.totalorder %s16, 0
    %p125 = por %p123, %p124
    %p126 = scmp.ne.s32.totalorder %s118, %s120
    %p127 = scmp.eq.s32.totalorder %s21, 1
    %p128 = por %p126, %p127
    %p129 = scmp.ne.s32.totalorder %s120, %s121
    %p130 = scmp.eq.s32.totalorder %s21, 0
    %p131 = por %p129, %p130
    %p132 = scmp.ne.s32.totalorder %s120, %s121
    %p133 = scmp.eq.s32.totalorder %s22, 1
    %p134 = por %p132, %p133
    %p136 = scmp.ne.s32.totalorder %s121, %s135
    %p137 = scmp.eq.s32.totalorder %s22, 0
    %p138 = por %p136, %p137
    %s140 = sadd.s32 %s139, 1
    %p143 = scmp.eq.s32.totalorder %s16, 1
    %p144 = scmp.ne.s32.totalorder %s139, %s141
    %p145 = scmp.eq.s32.totalorder %s16, 0
    %p146 = por %p144, %p145
    %p147 = scmp.ne.s32.totalorder %s139, %s141
    %p148 = scmp.eq.s32.totalorder %s21, 1
    %p149 = por %p147, %p148
    %p150 = scmp.ne.s32.totalorder %s141, %s142
    %p151 = scmp.eq.s32.totalorder %s21, 0
    %p152 = por %p150, %p151
    %p153 = scmp.ne.s32.totalorder %s141, %s142
    %p154 = scmp.eq.s32.totalorder %s22, 1
    %p155 = por %p153, %p154
    %p157 = scmp.ne.s32.totalorder %s142, %s156
    %p158 = scmp.eq.s32.totalorder %s22, 0
    %p159 = por %p157, %p158
    %s160 = ssub.s32 %s16, %s23
    %p161 = scmp.eq.s32.totalorder %s160, 0
    %s163 = sadd.s32 %s162, 1
    %s164 = scalar_select %p161, %s162, %s163
    %p167 = pneg %p161
    %p168 = scmp.eq.s32.totalorder %s16, 1
    %p169 = por %p167, %p168
    %p170 = scmp.ne.s32.totalorder %s162, %s165
    %p171 = scmp.eq.s32.totalorder %s16, 0
    %p172 = por %p170, %p171
    %p173 = scmp.ne.s32.totalorder %s162, %s165
    %p174 = scmp.eq.s32.totalorder %s21, 1
    %p175 = por %p173, %p174
    %p176 = scmp.ne.s32.totalorder %s165, %s166
    %p177 = scmp.eq.s32.totalorder %s21, 0
    %p178 = por %p176, %p177
    %p179 = scmp.ne.s32.totalorder %s165, %s166
    %p180 = scmp.eq.s32.totalorder %s22, 1
    %p181 = por %p179, %p180
    %p183 = scmp.ne.s32.totalorder %s166, %s182
    %p184 = scmp.eq.s32.totalorder %s22, 0
    %p185 = por %p183, %p184
    %s186 = ssub.s32 %s16, %s23
    %p187 = scmp.eq.s32.totalorder %s186, 0
    %s189 = sadd.s32 %s188, 1
    %s190 = scalar_select %p187, %s188, %s189
    %p193 = pneg %p187
    %p194 = scmp.eq.s32.totalorder %s16, 1
    %p195 = por %p193, %p194
    %p196 = scmp.ne.s32.totalorder %s188, %s191
    %p197 = scmp.eq.s32.totalorder %s16, 0
    %p198 = por %p196, %p197
    %p199 = scmp.ne.s32.totalorder %s188, %s191
    %p200 = scmp.eq.s32.totalorder %s21, 1
    %p201 = por %p199, %p200
    %p202 = scmp.ne.s32.totalorder %s191, %s192
    %p203 = scmp.eq.s32.totalorder %s21, 0
    %p204 = por %p202, %p203
    %p205 = scmp.ne.s32.totalorder %s191, %s192
    %p206 = scmp.eq.s32.totalorder %s22, 1
    %p207 = por %p205, %p206
    %p209 = scmp.ne.s32.totalorder %s192, %s208
    %p210 = scmp.eq.s32.totalorder %s22, 0
    %p211 = por %p209, %p210
    %s212 = ssub.s32 %s16, %s23
    %p213 = scmp.eq.s32.totalorder %s212, 0
    %s215 = sadd.s32 %s214, 1
    %s216 = scalar_select %p213, %s214, %s215
    %p219 = pneg %p213
    %p220 = scmp.eq.s32.totalorder %s16, 1
    %p221 = por %p219, %p220
    %p222 = scmp.ne.s32.totalorder %s214, %s217
    %p223 = scmp.eq.s32.totalorder %s16, 0
    %p224 = por %p222, %p223
    %p225 = scmp.ne.s32.totalorder %s214, %s217
    %p226 = scmp.eq.s32.totalorder %s21, 1
    %p227 = por %p225, %p226
    %p228 = scmp.ne.s32.totalorder %s217, %s218
    %p229 = scmp.eq.s32.totalorder %s21, 0
    %p230 = por %p228, %p229
    %p231 = scmp.ne.s32.totalorder %s217, %s218
    %p232 = scmp.eq.s32.totalorder %s22, 1
    %p233 = por %p231, %p232
    %p235 = scmp.ne.s32.totalorder %s218, %s234
    %p236 = scmp.eq.s32.totalorder %s22, 0
    %p237 = por %p235, %p236
    %s238 = ssub.s32 %s16, %s23
    %p239 = scmp.eq.s32.totalorder %s238, 0
    %s241 = sadd.s32 %s240, 1
    %s242 = scalar_select %p239, %s240, %s241
    %p245 = pneg %p239
    %p246 = scmp.eq.s32.totalorder %s16, 1
    %p247 = por %p245, %p246
    %p248 = scmp.ne.s32.totalorder %s240, %s243
    %p249 = scmp.eq.s32.totalorder %s16, 0
    %p250 = por %p248, %p249
    %p251 = scmp.ne.s32.totalorder %s240, %s243
    %p252 = scmp.eq.s32.totalorder %s21, 1
    %p253 = por %p251, %p252
    %p254 = scmp.ne.s32.totalorder %s243, %s244
    %p255 = scmp.eq.s32.totalorder %s21, 0
    %p256 = por %p254, %p255
    %p257 = scmp.ne.s32.totalorder %s243, %s244
    %p258 = scmp.eq.s32.totalorder %s22, 1
    %p259 = por %p257, %p258
    %p261 = scmp.ne.s32.totalorder %s244, %s260
    %p262 = scmp.eq.s32.totalorder %s22, 0
    %p263 = por %p261, %p262
    %p264 = scmp.le.s32.totalorder 1, %s16
    %p265 = scmp.lt.s32.totalorder %s16, 3
    %p266 = pnand %p264, %p265
    %p267 = pneg %p266
    // Predicated region
    $region9: #{gm_sv_v2_dense.1} parent=5 // pred_check
      _
    $region10: #{gm_sv_v2_dense.1} parent=5 // pred_check_branch
      %269 = sbr.rel (%p266) target = $region12
    $region11: #{gm_sv_v2_dense.1} parent=5 // pred_region
      %s270 = ssub.s32 %s16, 1
      // Predicated region
      $region13: #{gm_sv_v2_dense.1} parent=11 // pred_check
        %p271 = pneg %p89
      $region14: #{gm_sv_v2_dense.1} parent=11 // pred_check_branch
        %273 = sbr.rel (%p271) target = $region16
      $region15: #{gm_sv_v2_dense.1} parent=11 // pred_region
        _
      $region16: #{gm_sv_v2_dense.1} parent=11 // pred_fallthru
        _
      // Predicated region
      $region17: #{gm_sv_v2_dense.1} parent=11 // pred_check
        %p274 = pneg %p110
      $region18: #{gm_sv_v2_dense.1} parent=11 // pred_check_branch
        %276 = sbr.rel (%p274) target = $region20
      $region19: #{gm_sv_v2_dense.1} parent=11 // pred_region
        _
      $region20: #{gm_sv_v2_dense.1} parent=11 // pred_fallthru
        _
      // Predicated region
      $region21: #{gm_sv_v2_dense.1} parent=11 // pred_check
        %p277 = pneg %p131
      $region22: #{gm_sv_v2_dense.1} parent=11 // pred_check_branch
        %279 = sbr.rel (%p277) target = $region24
      $region23: #{gm_sv_v2_dense.1} parent=11 // pred_region
        _
      $region24: #{gm_sv_v2_dense.1} parent=11 // pred_fallthru
        _
      // Predicated region
      $region25: #{gm_sv_v2_dense.1} parent=11 // pred_check
        %p280 = pneg %p152
      $region26: #{gm_sv_v2_dense.1} parent=11 // pred_check_branch
        %282 = sbr.rel (%p280) target = $region28
      $region27: #{gm_sv_v2_dense.1} parent=11 // pred_region
        _
      $region28: #{gm_sv_v2_dense.1} parent=11 // pred_fallthru
        _
    $region12: #{gm_sv_v2_dense.1} parent=5 // pred_fallthru
      _
    %p283 = scmp.lt.s32.totalorder %s16, 2
    // Predicated region
    $region29: #{gm_sv_v2_dense.1} parent=5 // pred_check
      %p284 = pneg %p283
    $region30: #{gm_sv_v2_dense.1} parent=5 // pred_check_branch
      %286 = sbr.rel (%p284) target = $region32
    $region31: #{gm_sv_v2_dense.1} parent=5 // pred_region
      // Predicated region
      $region33: #{gm_sv_v2_dense.1} parent=31 // pred_check
        %p287 = pneg %p36
      $region34: #{gm_sv_v2_dense.1} parent=31 // pred_check_branch
        %289 = sbr.rel (%p287) target = $region36
      $region35: #{gm_sv_v2_dense.1} parent=31 // pred_region
        %p290 = scmp.lt.s32.totalorder %s16, 1
        %s291 = scalar_select %p290, %s16, 1
        %s292 = smul.addr %s291, 8
        %s293 = scalar_lea.vmem %s0, %s292
      $region36: #{gm_sv_v2_dense.1} parent=31 // pred_fallthru
        _
      // Predicated region
      $region37: #{gm_sv_v2_dense.1} parent=31 // pred_check
        %p294 = pneg %p62
      $region38: #{gm_sv_v2_dense.1} parent=31 // pred_check_branch
        %296 = sbr.rel (%p294) target = $region40
      $region39: #{gm_sv_v2_dense.1} parent=31 // pred_region
        %p297 = scmp.lt.s32.totalorder %s16, 1
        %s298 = scalar_select %p297, %s16, 1
        %s299 = smul.addr %s298, 2
        %s300 = smul.addr %s299, 8
        %s301 = scalar_lea.vmem %s1, %s300
      $region40: #{gm_sv_v2_dense.1} parent=31 // pred_fallthru
        _
      // Predicated region
      $region41: #{gm_sv_v2_dense.1} parent=31 // pred_check
        %p302 = pneg %p172
      $region42: #{gm_sv_v2_dense.1} parent=31 // pred_check_branch
        %304 = sbr.rel (%p302) target = $region44
      $region43: #{gm_sv_v2_dense.1} parent=31 // pred_region
        %p305 = scmp.lt.s32.totalorder %s16, 1
        %s306 = scalar_select %p305, %s16, 1
        %s307 = smul.addr %s306, 6
        %s308 = smul.addr %s307, 8
        %s309 = scalar_lea.vmem %s6, %s308
      $region44: #{gm_sv_v2_dense.1} parent=31 // pred_fallthru
        _
      // Predicated region
      $region45: #{gm_sv_v2_dense.1} parent=31 // pred_check
        %p310 = pneg %p198
      $region46: #{gm_sv_v2_dense.1} parent=31 // pred_check_branch
        %312 = sbr.rel (%p310) target = $region48
      $region47: #{gm_sv_v2_dense.1} parent=31 // pred_region
        %p313 = scmp.lt.s32.totalorder %s16, 1
        %s314 = scalar_select %p313, %s16, 1
        %s315 = smul.addr %s314, 6
        %s316 = smul.addr %s315, 8
        %s317 = scalar_lea.vmem %s7, %s316
      $region48: #{gm_sv_v2_dense.1} parent=31 // pred_fallthru
        _
    $region32: #{gm_sv_v2_dense.1} parent=5 // pred_fallthru
      _
    %p318 = scmp.le.s32.totalorder 1, %s16
    %p319 = scmp.lt.s32.totalorder %s16, 3
    %p320 = pnand %p318, %p319
    %p321 = pneg %p320
    // Predicated region
    $region49: #{gm_sv_v2_dense.1} parent=5 // pred_check
      _
    $region50: #{gm_sv_v2_dense.1} parent=5 // pred_check_branch
      %323 = sbr.rel (%p320) target = $region52
    $region51: #{gm_sv_v2_dense.1} parent=5 // pred_region
      %s324 = ssub.s32 %s16, 1
      %p325 = scmp.lt.s32.totalorder %s21, 1
      %s326 = scalar_select %p325, %s21, 1
      %s327 = smul.addr %s326, 8
      %s328 = scalar_lea.vmem %s0, %s327
      %p329 = pneg %p42
      %p330 = pneg %p39
      %p331 = scmp.lt.s32.totalorder %s21, 1
      %s332 = scalar_select %p331, %s21, 1
      %s333 = smul.addr %s332, 2
      %s334 = smul.addr %s333, 8
      %s335 = scalar_lea.vmem %s1, %s334
      %p336 = pneg %p68
      %p337 = pneg %p65
      %p338 = pneg %p89
      %p339 = pneg %p86
      %p340 = pneg %p110
      %p341 = pneg %p107
      %p342 = pneg %p131
      %p343 = pneg %p128
      %p344 = pneg %p152
      %p345 = pneg %p149
      %p346 = scmp.lt.s32.totalorder %s21, 1
      %s347 = scalar_select %p346, %s21, 1
      %s348 = smul.addr %s347, 6
      %s349 = smul.addr %s348, 8
      %s350 = scalar_lea.vmem %s6, %s349
      %p351 = pneg %p178
      %p352 = pneg %p175
      %p353 = scmp.lt.s32.totalorder %s21, 1
      %s354 = scalar_select %p353, %s21, 1
      %s355 = smul.addr %s354, 6
      %s356 = smul.addr %s355, 8
      %s357 = scalar_lea.vmem %s7, %s356
      %p358 = pneg %p204
      %p359 = pneg %p201
      %p360 = pneg %p230
      %p361 = pneg %p227
      %p362 = scmp.lt.s32.totalorder %s21, 1
      %s363 = scalar_select %p362, %s21, 1
      %s364 = smul.addr %s363, 3
      %s365 = smul.addr %s364, 8
      %s366 = scalar_lea.vmem %s8, %s365
      %p367 = pneg %p256
      %p368 = pneg %p253
      %p369 = scmp.lt.s32.totalorder %s21, 1
      %s370 = scalar_select %p369, %s21, 1
      %s371 = scalar_lea.vmem %s9, %s370
      %p372 = scmp.lt.s32.totalorder %s21, 1
      %s373 = scalar_select %p372, %s21, 1
      %s374 = smul.addr %s373, 8
      %s375 = scalar_lea.vmem %s0, %s374
      %p376 = scmp.lt.s32.totalorder %s21, 1
      %s377 = scalar_select %p376, %s21, 1
      %s378 = smul.addr %s377, 2
      %s379 = smul.addr %s378, 8
      %s380 = scalar_lea.vmem %s1, %s379
      %p381 = scmp.lt.s32.totalorder %s21, 1
      %s382 = scalar_select %p381, %s21, 1
      %s383 = smul.addr %s382, 6
      %s384 = smul.addr %s383, 8
      %s385 = scalar_lea.vmem %s6, %s384
      %p386 = scmp.lt.s32.totalorder %s21, 1
      %s387 = scalar_select %p386, %s21, 1
      %s388 = smul.addr %s387, 6
      %s389 = smul.addr %s388, 8
      %s390 = scalar_lea.vmem %s7, %s389
      %p391 = scmp.lt.s32.totalorder %s21, 1
      %s392 = scalar_select %p391, %s21, 1
      %s393 = smul.addr %s392, 3
      %s394 = smul.addr %s393, 8
      %s395 = scalar_lea.vmem %s8, %s394
      %p396 = scmp.lt.s32.totalorder %s21, 1
      %s397 = scalar_select %p396, %s21, 1
      %s398 = scalar_lea.vmem %s9, %s397
      %v400 = vld [vmem:[%s375] sm:$0xff]
      %v401 = vld [vmem:[%s380] sm:$0xff]
      %v402 = vld [vmem:[%s380 + $0x8] sm:$0xff]
      %v404 = vrot.slane %v400, 1
      %v405 = vrot.slane %v400, 2
      %v406 = vrot.slane %v400, 3
      %v407 = vrot.slane %v400, 4
      %v408 = vrot.slane %v400, 5
      %v409 = vrot.slane %v400, 6
      %v410 = vrot.slane %v400, 7
      %v411 = vperm.slane %v400, 0
      %v412 = vperm.slane %v404, 0
      %v413 = vperm.slane %v405, 0
      %v414 = vperm.slane %v406, 0
      %v415 = vperm.slane %v407, 0
      %v416 = vperm.slane %v408, 0
      %v417 = vperm.slane %v409, 0
      %v418 = vperm.slane %v410, 0
      %v427 = vadd.f32 %v411, %v401
      %v428 = vadd.f32 %v411, %v402
      %v429 = vadd.f32 %v412, %v401
      %v430 = vadd.f32 %v412, %v402
      %v431 = vadd.f32 %v413, %v401
      %v432 = vadd.f32 %v413, %v402
      %v433 = vadd.f32 %v414, %v401
      %v434 = vadd.f32 %v414, %v402
      %v435 = vadd.f32 %v415, %v401
      %v436 = vadd.f32 %v415, %v402
      %v437 = vadd.f32 %v416, %v401
      %v438 = vadd.f32 %v416, %v402
      %v439 = vadd.f32 %v417, %v401
      %v440 = vadd.f32 %v417, %v402
      %v441 = vadd.f32 %v418, %v401
      %v442 = vadd.f32 %v418, %v402
      %443 = vxpose.xlu0.b32.start [1/16] %v427, 128
      %444 = vxpose.xlu0.b32.cont [2/16] %v428, 128
      %445 = vxpose.xlu0.b32.cont [3/16] %v429, 128
      %446 = vxpose.xlu0.b32.cont [4/16] %v430, 128
      %447 = vxpose.xlu0.b32.cont [5/16] %v431, 128
      %448 = vxpose.xlu0.b32.cont [6/16] %v432, 128
      %449 = vxpose.xlu0.b32.cont [7/16] %v433, 128
      %450 = vxpose.xlu0.b32.cont [8/16] %v434, 128
      %451 = vxpose.xlu0.b32.cont [9/16] %v435, 128
      %452 = vxpose.xlu0.b32.cont [10/16] %v436, 128
      %453 = vxpose.xlu0.b32.cont [11/16] %v437, 128
      %454 = vxpose.xlu0.b32.cont [12/16] %v438, 128
      %455 = vxpose.xlu0.b32.cont [13/16] %v439, 128
      %456 = vxpose.xlu0.b32.cont [14/16] %v440, 128
      %457 = vxpose.xlu0.b32.cont [15/16] %v441, 128
      %458 = vxpose.xlu0.b32.end [16/16] %v442, 128
      %v459 = vpop.trf.xlu0
      %v460 = vpop.trf.xlu0
      %v461 = vpop.trf.xlu0
      %v462 = vpop.trf.xlu0
      %v463 = vpop.trf.xlu0
      %v464 = vpop.trf.xlu0
      %v465 = vpop.trf.xlu0
      %v466 = vpop.trf.xlu0
      %v467 = vpop.trf.xlu0
      %v468 = vpop.trf.xlu0
      %v469 = vpop.trf.xlu0
      %v470 = vpop.trf.xlu0
      %v471 = vpop.trf.xlu0
      %v472 = vpop.trf.xlu0
      %v473 = vpop.trf.xlu0
      %v474 = vpop.trf.xlu0
      %v475 = vpack.c.bf16 %v460, %v459
      %v476 = vpack.c.bf16 %v462, %v461
      %v477 = vld [vmem:[%s2] sm:$0xf]
      %v478 = vld [vmem:[%s2 + $0x4] sm:$0xf]
      %v479 = vld [vmem:[%s2 + $0x8] sm:$0xf]
      %v480 = vld [vmem:[%s2 + $0xc] sm:$0xf]
      %v481 = vld [vmem:[%s3] sm:$0xff]
      %v482 = vld [vmem:[%s3 + $0x8] sm:$0xff]
      %v483 = vld [vmem:[%s3 + $0x10] sm:$0xff]
      %v484 = vld [vmem:[%s3 + $0x18] sm:$0xff]
      %486 = vset.pattern.permute.xlu0 0
      %487 = vperm.xlu0 %486, %v481
      %v488 = vpop.permute.xlu0 %487
      %491 = vset.pattern.permute.xlu0 0
      %492 = vperm.xlu0 %491, %v482
      %v493 = vpop.permute.xlu0 %492
      %496 = vset.pattern.permute.xlu0 0
      %497 = vperm.xlu0 %496, %v483
      %v498 = vpop.permute.xlu0 %497
      %501 = vset.pattern.permute.xlu0 0
      %502 = vperm.xlu0 %501, %v484
      %v503 = vpop.permute.xlu0 %502
      %v509 = vunpack.c.l.b16 %v477
      %v510 = vunpack.c.l.b16 %v478
      %v511 = vunpack.c.l.b16 %v479
      %v512 = vunpack.c.l.b16 %v480
      %v513 = vpack.c.b16 %v510, %v509
      %v514 = vpack.c.b16 %v512, %v511
      %vm515 = vcmask 261120
      %v517 = vsel %vm515, %v513, 0
      %v520 = vsel %vm515, %v514, 0
      %522 = vmatpush.bf16.msra.mxu0 0
      %523 = vmatpush.bf16.msra.mxu0 0
      %524 = vmatpush.bf16.msra.mxu0 0
      %525 = vmatpush.bf16.msra.mxu0 0
      %526 = vmatpush.bf16.msra.mxu0 0
      %527 = vmatpush.bf16.msra.mxu0 0
      %528 = vmatpush.bf16.msra.mxu0 %v476
      %529 = vmatpush.bf16.msra.mxu0 %v475
      %530 = vmatmul.bf16.gmra.mxu0 %v517
      %v531 = vpop.f32.mrf.mxu0
      %v532 = vadd.f32 %v488, %v531
      %v533 = vpop.f32.mrf.mxu0
      %v534 = vadd.f32 %v493, %v533
      %535 = vmatmul.bf16.gmra.mxu0 %v520
      %v536 = vpop.f32.mrf.mxu0
      %v537 = vadd.f32 %v498, %v536
      %v538 = vpop.f32.mrf.mxu0
      %v539 = vadd.f32 %v503, %v538
      %540 = vdwg.mxu0
      %vm541 = vcmp.gt.f32.partialorder %v532, 0.0
      %vm542 = vcmp.gt.f32.partialorder %v534, 0.0
      %vm543 = vcmp.gt.f32.partialorder %v537, 0.0
      %vm544 = vcmp.gt.f32.partialorder %v539, 0.0
      %v545 = vmul.f32 %v532, 1.442695
      %v546 = vpow.pop %v545
      %v547 = vmul.f32 %v534, 1.442695
      %v548 = vpow.pop %v547
      %v549 = vmul.f32 %v537, 1.442695
      %v550 = vpow.pop %v549
      %v551 = vmul.f32 %v539, 1.442695
      %v552 = vpow.pop %v551
      %v553 = vsub.f32 %v546, 1.0
      %v554 = vsub.f32 %v548, 1.0
      %v555 = vsub.f32 %v550, 1.0
      %v556 = vsub.f32 %v552, 1.0
      %v557 = vsel %vm541, %v532, %v553
      %v558 = vsel %vm542, %v534, %v554
      %v559 = vsel %vm543, %v537, %v555
      %v560 = vsel %vm544, %v539, %v556
      %v561 = vld [vmem:[%s4] sm:$0xf]
      %v562 = vld [vmem:[%s4 + $0x4] sm:$0xf]
      %v563 = vld [vmem:[%s4 + $0x8] sm:$0xf]
      %v564 = vpack.c.bf16 %v558, %v557
      %v565 = vpack.c.bf16 %v560, %v559
      %v566 = vld [vmem:[%s5] sm:$0xff]
      %v567 = vld [vmem:[%s5 + $0x8] sm:$0xff]
      %v568 = vld [vmem:[%s5 + $0x10] sm:$0xff]
      %570 = vset.pattern.permute.xlu0 0
      %571 = vperm.xlu0 %570, %v566
      %v572 = vpop.permute.xlu0 %571
      %575 = vset.pattern.permute.xlu0 0
      %576 = vperm.xlu0 %575, %v567
      %v577 = vpop.permute.xlu0 %576
      %580 = vset.pattern.permute.xlu0 0
      %581 = vperm.xlu0 %580, %v568
      %v582 = vpop.permute.xlu0 %581
      %v587 = vunpack.c.l.b16 %v561
      %v588 = vunpack.c.l.b16 %v562
      %v589 = vunpack.c.l.b16 %v563
      %v590 = vpack.c.b16 %v588, %v587
      %v591 = vpack.c.b16 %v589, %v589
      %v593 = vsel %vm515, %v590, 0
      %v596 = vsel %vm515, %v591, 0
      %598 = vmatpush.bf16.msra.mxu0 0
      %599 = vmatpush.bf16.msra.mxu0 0
      %600 = vmatpush.bf16.msra.mxu0 0
      %601 = vmatpush.bf16.msra.mxu0 0
      %602 = vmatpush.bf16.msra.mxu0 0
      %603 = vmatpush.bf16.msra.mxu0 0
      %604 = vmatpush.bf16.msra.mxu0 %v565
      %605 = vmatpush.bf16.msra.mxu0 %v564
      %606 = vmatmul.bf16.gmra.mxu0 %v593
      %v607 = vpop.f32.mrf.mxu0
      %v608 = vadd.f32 %v572, %v607
      %v609 = vpop.f32.mrf.mxu0
      %v610 = vadd.f32 %v577, %v609
      %611 = vmatmul.bf16.gmra.mxu0 %v596
      %v612 = vpop.f32.mrf.mxu0
      %v613 = vadd.f32 %v582, %v612
      %v614 = vpop.f32.mrf.mxu0
      %615 = vdwg.mxu0
      %v616 = vrot.slane %v608, 4
      %v617 = vmax.f32 %v608, %v616
      %v618 = vrot.slane %v617, 2
      %v619 = vmax.f32 %v617, %v618
      %v620 = vrot.slane %v619, 1
      %v621 = vmax.f32 %v619, %v620
      %v622 = vsub.f32 %v608, %v621
      %v623 = vmul.f32 %v622, 1.442695
      %v624 = vpow.pop %v623
      %v625 = vrot.slane %v624, 4
      %v626 = vadd.f32 %v624, %v625
      %v627 = vrot.slane %v626, 2
      %v628 = vadd.f32 %v626, %v627
      %v629 = vrot.slane %v628, 1
      %v630 = vadd.f32 %v628, %v629
      %v631 = vrcp.pop %v630
      %v632 = vmul.f32 %v630, %v631
      %v633 = vsub.f32 1.0, %v632
      %v634 = vmul.f32 %v631, %v633
      %v635 = vadd.f32 %v631, %v634
      %vm636 = vweird.f32 %v630
      %vm637 = vweird.f32 %v631
      %vm638 = vmor %vm636, %vm637
      %v639 = vsel %vm638, %v631, %v635
      %v640 = vand.u32 2147483647, %v630
      %vm641 = vcmp.eq.f32.partialorder %v640, 8.507059e+37
      %v642 = vand.u32 %v630, 2147483648
      %v643 = vor.u32 1.1754944e-38, %v642
      %v644 = vsel %vm641, %v643, %v639
      %v645 = vmul.f32 %v624, %v644
      %646 = vst [vmem:[%s395] sm:$0xff] %v645
      %vm647 = vcmp.gt.f32.partialorder %v610, 0.0
      %v648 = vmul.f32 %v610, 1.442695
      %v649 = vpow.pop %v648
      %v650 = vsub.f32 %v649, 1.0
      %v651 = vsel %vm647, %v610, %v650
      %v652 = vadd.f32 %v651, 1.1
      %653 = vst [vmem:[%s395 + $0x8] sm:$0xff] %v652
      %vm654 = vcmp.gt.f32.partialorder %v613, 0.0
      %v655 = vmul.f32 %v613, 1.442695
      %v656 = vpow.pop %v655
      %v657 = vsub.f32 %v656, 1.0
      %v658 = vsel %vm654, %v613, %v657
      %v659 = vadd.f32 %v658, 1.0
      %660 = vst [vmem:[%s395 + $0x10] sm:$0xff] %v659
      %v661 = vld [vmem:[%s385] sm:$0xff]
      %v662 = vld [vmem:[%s385 + $0x8] sm:$0x7f]
      %s663 = scalar_lea.vmem %s385, 16
      %v664 = vld [vmem:[%s663] sm:$0xff]
      %v665 = vld [vmem:[%s663 + $0x8] sm:$0x7f]
      %s666 = scalar_lea.vmem %s385, 32
      %v667 = vld [vmem:[%s666] sm:$0xff]
      %v668 = vld [vmem:[%s666 + $0x8] sm:$0x7f]
      %v669 = vld [vmem:[%s390] sm:$0xff]
      %v670 = vld [vmem:[%s390 + $0x8] sm:$0x7f]
      %s671 = scalar_lea.vmem %s390, 16
      %v672 = vld [vmem:[%s671] sm:$0xff]
      %v673 = vld [vmem:[%s671 + $0x8] sm:$0x7f]
      %s674 = scalar_lea.vmem %s390, 32
      %v675 = vld [vmem:[%s674] sm:$0xff]
      %v676 = vld [vmem:[%s674 + $0x8] sm:$0x7f]
      %v677 = vmul.f32 %v661, %v661
      %v678 = vmul.f32 %v662, %v662
      %v679 = vmul.f32 %v664, %v664
      %v680 = vmul.f32 %v665, %v665
      %v681 = vadd.f32 %v677, %v679
      %v682 = vadd.f32 %v678, %v680
      %v683 = vmul.f32 %v667, %v667
      %v684 = vmul.f32 %v668, %v668
      %v685 = vadd.f32 %v681, %v683
      %v686 = vadd.f32 %v682, %v684
      %v687 = vmul.f32 %v669, %v669
      %v688 = vmul.f32 %v670, %v670
      %v689 = vmul.f32 %v672, %v672
      %v690 = vmul.f32 %v673, %v673
      %v691 = vadd.f32 %v687, %v689
      %v692 = vadd.f32 %v688, %v690
      %v693 = vmul.f32 %v675, %v675
      %v694 = vmul.f32 %v676, %v676
      %v695 = vadd.f32 %v691, %v693
      %v696 = vadd.f32 %v692, %v694
      %v697 = vmul.f32 %v661, -2.0
      %v698 = vmul.f32 %v662, -2.0
      %v699 = vmul.f32 %v664, -2.0
      %v700 = vmul.f32 %v665, -2.0
      %v701 = vmul.f32 %v667, -2.0
      %v702 = vmul.f32 %v668, -2.0
      %v703 = vperm.slane %v669, 0
      %v704 = vmul.f32 %v697, %v703
      %v705 = vmul.f32 %v698, %v703
      %v706 = vperm.slane %v672, 0
      %v707 = vmul.f32 %v699, %v706
      %v708 = vmul.f32 %v700, %v706
      %v709 = vadd.f32 %v704, %v707
      %v710 = vadd.f32 %v705, %v708
      %v711 = vperm.slane %v675, 0
      %v712 = vmul.f32 %v701, %v711
      %v713 = vmul.f32 %v702, %v711
      %v714 = vadd.f32 %v709, %v712
      %v715 = vadd.f32 %v710, %v713
      %v716 = vadd.f32 %v714, %v685
      %v717 = vadd.f32 %v715, %v686
      %v718 = vperm.slane %v695, 0
      %v719 = vadd.f32 %v716, %v718
      %v720 = vadd.f32 %v717, %v718
      %vm721 = vcmp.ge.f32.partialorder %v719, 0.0
      %vm722 = vcmp.ge.f32.partialorder %v720, 0.0
      %v723 = vsel %vm721, %v719, 1e+08
      %v724 = vsel %vm722, %v720, 1e+08
      %v725 = vmin.f32 %v723, 1e+08
      %v726 = vmin.f32 %v724, 1e+08
      %v727 = vperm.slane %v669, 1
      %v728 = vmul.f32 %v697, %v727
      %v729 = vmul.f32 %v698, %v727
      %v730 = vperm.slane %v672, 1
      %v731 = vmul.f32 %v699, %v730
      %v732 = vmul.f32 %v700, %v730
      %v733 = vadd.f32 %v728, %v731
      %v734 = vadd.f32 %v729, %v732
      %v735 = vperm.slane %v675, 1
      %v736 = vmul.f32 %v701, %v735
      %v737 = vmul.f32 %v702, %v735
      %v738 = vadd.f32 %v733, %v736
      %v739 = vadd.f32 %v734, %v737
      %v740 = vadd.f32 %v738, %v685
      %v741 = vadd.f32 %v739, %v686
      %v742 = vperm.slane %v695, 1
      %v743 = vadd.f32 %v740, %v742
      %v744 = vadd.f32 %v741, %v742
      %vm745 = vcmp.ge.f32.partialorder %v743, 0.0
      %vm746 = vcmp.ge.f32.partialorder %v744, 0.0
      %v747 = vsel %vm745, %v743, 1e+08
      %v748 = vsel %vm746, %v744, 1e+08
      %v749 = vmin.f32 %v725, %v747
      %v750 = vmin.f32 %v726, %v748
      %v751 = vperm.slane %v669, 2
      %v752 = vmul.f32 %v697, %v751
      %v753 = vmul.f32 %v698, %v751
      %v754 = vperm.slane %v672, 2
      %v755 = vmul.f32 %v699, %v754
      %v756 = vmul.f32 %v700, %v754
      %v757 = vadd.f32 %v752, %v755
      %v758 = vadd.f32 %v753, %v756
      %v759 = vperm.slane %v675, 2
      %v760 = vmul.f32 %v701, %v759
      %v761 = vmul.f32 %v702, %v759
      %v762 = vadd.f32 %v757, %v760
      %v763 = vadd.f32 %v758, %v761
      %v764 = vadd.f32 %v762, %v685
      %v765 = vadd.f32 %v763, %v686
      %v766 = vperm.slane %v695, 2
      %v767 = vadd.f32 %v764, %v766
      %v768 = vadd.f32 %v765, %v766
      %vm769 = vcmp.ge.f32.partialorder %v767, 0.0
      %vm770 = vcmp.ge.f32.partialorder %v768, 0.0
      %v771 = vsel %vm769, %v767, 1e+08
      %v772 = vsel %vm770, %v768, 1e+08
      %v773 = vmin.f32 %v749, %v771
      %v774 = vmin.f32 %v750, %v772
      %v775 = vperm.slane %v669, 3
      %v776 = vmul.f32 %v697, %v775
      %v777 = vmul.f32 %v698, %v775
      %v778 = vperm.slane %v672, 3
      %v779 = vmul.f32 %v699, %v778
      %v780 = vmul.f32 %v700, %v778
      %v781 = vadd.f32 %v776, %v779
      %v782 = vadd.f32 %v777, %v780
      %v783 = vperm.slane %v675, 3
      %v784 = vmul.f32 %v701, %v783
      %v785 = vmul.f32 %v702, %v783
      %v786 = vadd.f32 %v781, %v784
      %v787 = vadd.f32 %v782, %v785
      %v788 = vadd.f32 %v786, %v685
      %v789 = vadd.f32 %v787, %v686
      %v790 = vperm.slane %v695, 3
      %v791 = vadd.f32 %v788, %v790
      %v792 = vadd.f32 %v789, %v790
      %vm793 = vcmp.ge.f32.partialorder %v791, 0.0
      %vm794 = vcmp.ge.f32.partialorder %v792, 0.0
      %v795 = vsel %vm793, %v791, 1e+08
      %v796 = vsel %vm794, %v792, 1e+08
      %v797 = vmin.f32 %v773, %v795
      %v798 = vmin.f32 %v774, %v796
      %v799 = vperm.slane %v669, 4
      %v800 = vmul.f32 %v697, %v799
      %v801 = vmul.f32 %v698, %v799
      %v802 = vperm.slane %v672, 4
      %v803 = vmul.f32 %v699, %v802
      %v804 = vmul.f32 %v700, %v802
      %v805 = vadd.f32 %v800, %v803
      %v806 = vadd.f32 %v801, %v804
      %v807 = vperm.slane %v675, 4
      %v808 = vmul.f32 %v701, %v807
      %v809 = vmul.f32 %v702, %v807
      %v810 = vadd.f32 %v805, %v808
      %v811 = vadd.f32 %v806, %v809
      %v812 = vadd.f32 %v810, %v685
      %v813 = vadd.f32 %v811, %v686
      %v814 = vperm.slane %v695, 4
      %v815 = vadd.f32 %v812, %v814
      %v816 = vadd.f32 %v813, %v814
      %vm817 = vcmp.ge.f32.partialorder %v815, 0.0
      %vm818 = vcmp.ge.f32.partialorder %v816, 0.0
      %v819 = vsel %vm817, %v815, 1e+08
      %v820 = vsel %vm818, %v816, 1e+08
      %v821 = vmin.f32 %v797, %v819
      %v822 = vmin.f32 %v798, %v820
      %v823 = vperm.slane %v669, 5
      %v824 = vmul.f32 %v697, %v823
      %v825 = vmul.f32 %v698, %v823
      %v826 = vperm.slane %v672, 5
      %v827 = vmul.f32 %v699, %v826
      %v828 = vmul.f32 %v700, %v826
      %v829 = vadd.f32 %v824, %v827
      %v830 = vadd.f32 %v825, %v828
      %v831 = vperm.slane %v675, 5
      %v832 = vmul.f32 %v701, %v831
      %v833 = vmul.f32 %v702, %v831
      %v834 = vadd.f32 %v829, %v832
      %v835 = vadd.f32 %v830, %v833
      %v836 = vadd.f32 %v834, %v685
      %v837 = vadd.f32 %v835, %v686
      %v838 = vperm.slane %v695, 5
      %v839 = vadd.f32 %v836, %v838
      %v840 = vadd.f32 %v837, %v838
      %vm841 = vcmp.ge.f32.partialorder %v839, 0.0
      %vm842 = vcmp.ge.f32.partialorder %v840, 0.0
      %v843 = vsel %vm841, %v839, 1e+08
      %v844 = vsel %vm842, %v840, 1e+08
      %v845 = vmin.f32 %v821, %v843
      %v846 = vmin.f32 %v822, %v844
      %v847 = vperm.slane %v669, 6
      %v848 = vmul.f32 %v697, %v847
      %v849 = vmul.f32 %v698, %v847
      %v850 = vperm.slane %v672, 6
      %v851 = vmul.f32 %v699, %v850
      %v852 = vmul.f32 %v700, %v850
      %v853 = vadd.f32 %v848, %v851
      %v854 = vadd.f32 %v849, %v852
      %v855 = vperm.slane %v675, 6
      %v856 = vmul.f32 %v701, %v855
      %v857 = vmul.f32 %v702, %v855
      %v858 = vadd.f32 %v853, %v856
      %v859 = vadd.f32 %v854, %v857
      %v860 = vadd.f32 %v858, %v685
      %v861 = vadd.f32 %v859, %v686
      %v862 = vperm.slane %v695, 6
      %v863 = vadd.f32 %v860, %v862
      %v864 = vadd.f32 %v861, %v862
      %vm865 = vcmp.ge.f32.partialorder %v863, 0.0
      %vm866 = vcmp.ge.f32.partialorder %v864, 0.0
      %v867 = vsel %vm865, %v863, 1e+08
      %v868 = vsel %vm866, %v864, 1e+08
      %v869 = vmin.f32 %v845, %v867
      %v870 = vmin.f32 %v846, %v868
      %v871 = vperm.slane %v669, 7
      %v872 = vmul.f32 %v697, %v871
      %v873 = vmul.f32 %v698, %v871
      %v874 = vperm.slane %v672, 7
      %v875 = vmul.f32 %v699, %v874
      %v876 = vmul.f32 %v700, %v874
      %v877 = vadd.f32 %v872, %v875
      %v878 = vadd.f32 %v873, %v876
      %v879 = vperm.slane %v675, 7
      %v880 = vmul.f32 %v701, %v879
      %v881 = vmul.f32 %v702, %v879
      %v882 = vadd.f32 %v877, %v880
      %v883 = vadd.f32 %v878, %v881
      %v884 = vadd.f32 %v882, %v685
      %v885 = vadd.f32 %v883, %v686
      %v886 = vperm.slane %v695, 7
      %v887 = vadd.f32 %v884, %v886
      %v888 = vadd.f32 %v885, %v886
      %vm889 = vcmp.ge.f32.partialorder %v887, 0.0
      %vm890 = vcmp.ge.f32.partialorder %v888, 0.0
      %v891 = vsel %vm889, %v887, 1e+08
      %v892 = vsel %vm890, %v888, 1e+08
      %v893 = vmin.f32 %v869, %v891
      %v894 = vmin.f32 %v870, %v892
      %v895 = vperm.slane %v670, 0
      %v896 = vmul.f32 %v697, %v895
      %v897 = vmul.f32 %v698, %v895
      %v898 = vperm.slane %v673, 0
      %v899 = vmul.f32 %v699, %v898
      %v900 = vmul.f32 %v700, %v898
      %v901 = vadd.f32 %v896, %v899
      %v902 = vadd.f32 %v897, %v900
      %v903 = vperm.slane %v676, 0
      %v904 = vmul.f32 %v701, %v903
      %v905 = vmul.f32 %v702, %v903
      %v906 = vadd.f32 %v901, %v904
      %v907 = vadd.f32 %v902, %v905
      %v908 = vadd.f32 %v906, %v685
      %v909 = vadd.f32 %v907, %v686
      %v910 = vperm.slane %v696, 0
      %v911 = vadd.f32 %v908, %v910
      %v912 = vadd.f32 %v909, %v910
      %vm913 = vcmp.ge.f32.partialorder %v911, 0.0
      %vm914 = vcmp.ge.f32.partialorder %v912, 0.0
      %v915 = vsel %vm913, %v911, 1e+08
      %v916 = vsel %vm914, %v912, 1e+08
      %v917 = vmin.f32 %v893, %v915
      %v918 = vmin.f32 %v894, %v916
      %v919 = vperm.slane %v670, 1
      %v920 = vmul.f32 %v697, %v919
      %v921 = vmul.f32 %v698, %v919
      %v922 = vperm.slane %v673, 1
      %v923 = vmul.f32 %v699, %v922
      %v924 = vmul.f32 %v700, %v922
      %v925 = vadd.f32 %v920, %v923
      %v926 = vadd.f32 %v921, %v924
      %v927 = vperm.slane %v676, 1
      %v928 = vmul.f32 %v701, %v927
      %v929 = vmul.f32 %v702, %v927
      %v930 = vadd.f32 %v925, %v928
      %v931 = vadd.f32 %v926, %v929
      %v932 = vadd.f32 %v930, %v685
      %v933 = vadd.f32 %v931, %v686
      %v934 = vperm.slane %v696, 1
      %v935 = vadd.f32 %v932, %v934
      %v936 = vadd.f32 %v933, %v934
      %vm937 = vcmp.ge.f32.partialorder %v935, 0.0
      %vm938 = vcmp.ge.f32.partialorder %v936, 0.0
      %v939 = vsel %vm937, %v935, 1e+08
      %v940 = vsel %vm938, %v936, 1e+08
      %v941 = vmin.f32 %v917, %v939
      %v942 = vmin.f32 %v918, %v940
      %v943 = vperm.slane %v670, 2
      %v944 = vmul.f32 %v697, %v943
      %v945 = vmul.f32 %v698, %v943
      %v946 = vperm.slane %v673, 2
      %v947 = vmul.f32 %v699, %v946
      %v948 = vmul.f32 %v700, %v946
      %v949 = vadd.f32 %v944, %v947
      %v950 = vadd.f32 %v945, %v948
      %v951 = vperm.slane %v676, 2
      %v952 = vmul.f32 %v701, %v951
      %v953 = vmul.f32 %v702, %v951
      %v954 = vadd.f32 %v949, %v952
      %v955 = vadd.f32 %v950, %v953
      %v956 = vadd.f32 %v954, %v685
      %v957 = vadd.f32 %v955, %v686
      %v958 = vperm.slane %v696, 2
      %v959 = vadd.f32 %v956, %v958
      %v960 = vadd.f32 %v957, %v958
      %vm961 = vcmp.ge.f32.partialorder %v959, 0.0
      %vm962 = vcmp.ge.f32.partialorder %v960, 0.0
      %v963 = vsel %vm961, %v959, 1e+08
      %v964 = vsel %vm962, %v960, 1e+08
      %v965 = vmin.f32 %v941, %v963
      %v966 = vmin.f32 %v942, %v964
      %v967 = vperm.slane %v670, 3
      %v968 = vmul.f32 %v697, %v967
      %v969 = vmul.f32 %v698, %v967
      %v970 = vperm.slane %v673, 3
      %v971 = vmul.f32 %v699, %v970
      %v972 = vmul.f32 %v700, %v970
      %v973 = vadd.f32 %v968, %v971
      %v974 = vadd.f32 %v969, %v972
      %v975 = vperm.slane %v676, 3
      %v976 = vmul.f32 %v701, %v975
      %v977 = vmul.f32 %v702, %v975
      %v978 = vadd.f32 %v973, %v976
      %v979 = vadd.f32 %v974, %v977
      %v980 = vadd.f32 %v978, %v685
      %v981 = vadd.f32 %v979, %v686
      %v982 = vperm.slane %v696, 3
      %v983 = vadd.f32 %v980, %v982
      %v984 = vadd.f32 %v981, %v982
      %vm985 = vcmp.ge.f32.partialorder %v983, 0.0
      %vm986 = vcmp.ge.f32.partialorder %v984, 0.0
      %v987 = vsel %vm985, %v983, 1e+08
      %v988 = vsel %vm986, %v984, 1e+08
      %v989 = vmin.f32 %v965, %v987
      %v990 = vmin.f32 %v966, %v988
      %v991 = vperm.slane %v670, 4
      %v992 = vmul.f32 %v697, %v991
      %v993 = vmul.f32 %v698, %v991
      %v994 = vperm.slane %v673, 4
      %v995 = vmul.f32 %v699, %v994
      %v996 = vmul.f32 %v700, %v994
      %v997 = vadd.f32 %v992, %v995
      %v998 = vadd.f32 %v993, %v996
      %v999 = vperm.slane %v676, 4
      %v1000 = vmul.f32 %v701, %v999
      %v1001 = vmul.f32 %v702, %v999
      %v1002 = vadd.f32 %v997, %v1000
      %v1003 = vadd.f32 %v998, %v1001
      %v1004 = vadd.f32 %v1002, %v685
      %v1005 = vadd.f32 %v1003, %v686
      %v1006 = vperm.slane %v696, 4
      %v1007 = vadd.f32 %v1004, %v1006
      %v1008 = vadd.f32 %v1005, %v1006
      %vm1009 = vcmp.ge.f32.partialorder %v1007, 0.0
      %vm1010 = vcmp.ge.f32.partialorder %v1008, 0.0
      %v1011 = vsel %vm1009, %v1007, 1e+08
      %v1012 = vsel %vm1010, %v1008, 1e+08
      %v1013 = vmin.f32 %v989, %v1011
      %v1014 = vmin.f32 %v990, %v1012
      %v1015 = vperm.slane %v670, 5
      %v1016 = vmul.f32 %v697, %v1015
      %v1017 = vmul.f32 %v698, %v1015
      %v1018 = vperm.slane %v673, 5
      %v1019 = vmul.f32 %v699, %v1018
      %v1020 = vmul.f32 %v700, %v1018
      %v1021 = vadd.f32 %v1016, %v1019
      %v1022 = vadd.f32 %v1017, %v1020
      %v1023 = vperm.slane %v676, 5
      %v1024 = vmul.f32 %v701, %v1023
      %v1025 = vmul.f32 %v702, %v1023
      %v1026 = vadd.f32 %v1021, %v1024
      %v1027 = vadd.f32 %v1022, %v1025
      %v1028 = vadd.f32 %v1026, %v685
      %v1029 = vadd.f32 %v1027, %v686
      %v1030 = vperm.slane %v696, 5
      %v1031 = vadd.f32 %v1028, %v1030
      %v1032 = vadd.f32 %v1029, %v1030
      %vm1033 = vcmp.ge.f32.partialorder %v1031, 0.0
      %vm1034 = vcmp.ge.f32.partialorder %v1032, 0.0
      %v1035 = vsel %vm1033, %v1031, 1e+08
      %v1036 = vsel %vm1034, %v1032, 1e+08
      %v1037 = vmin.f32 %v1013, %v1035
      %v1038 = vmin.f32 %v1014, %v1036
      %v1039 = vperm.slane %v670, 6
      %v1040 = vmul.f32 %v697, %v1039
      %v1041 = vmul.f32 %v698, %v1039
      %v1042 = vperm.slane %v673, 6
      %v1043 = vmul.f32 %v699, %v1042
      %v1044 = vmul.f32 %v700, %v1042
      %v1045 = vadd.f32 %v1040, %v1043
      %v1046 = vadd.f32 %v1041, %v1044
      %v1047 = vperm.slane %v676, 6
      %v1048 = vmul.f32 %v701, %v1047
      %v1049 = vmul.f32 %v702, %v1047
      %v1050 = vadd.f32 %v1045, %v1048
      %v1051 = vadd.f32 %v1046, %v1049
      %v1052 = vadd.f32 %v1050, %v685
      %v1053 = vadd.f32 %v1051, %v686
      %v1054 = vperm.slane %v696, 6
      %v1055 = vadd.f32 %v1052, %v1054
      %v1056 = vadd.f32 %v1053, %v1054
      %vm1057 = vcmp.ge.f32.partialorder %v1055, 0.0
      %vm1058 = vcmp.ge.f32.partialorder %v1056, 0.0
      %v1059 = vsel %vm1057, %v1055, 1e+08
      %v1060 = vsel %vm1058, %v1056, 1e+08
      %v1061 = vmin.f32 %v1037, %v1059
      %v1062 = vmin.f32 %v1038, %v1060
      %vm1063 = vcmask 1046528
      %v1064 = vsel %vm1063, %v1062, inf
      %v1065 = vmin.f32 %v1061, %v1064
      %v1066 = vrot.slane %v1065, 4
      %v1067 = vmin.f32 %v1065, %v1066
      %v1068 = vrot.slane %v1067, 2
      %v1069 = vmin.f32 %v1067, %v1068
      %v1070 = vrot.slane %v1069, 1
      %v1071 = vmin.f32 %v1069, %v1070
      %v1072 = vrsqrt.pop %v1071
      %v1073 = vmul.f32 %v1072, %v1071
      %v1074 = vmul.f32 %v1073, %v1072
      %v1075 = vmul.f32 0.5, %v1074
      %v1076 = vsub.f32 1.5, %v1075
      %v1077 = vmul.f32 %v1072, %v1076
      %v1078 = vmul.f32 %v1071, %v1077
      %vm1079 = vcmp.eq.f32.partialorder %v1071, inf
      %v1080 = vsel %vm1079, %v1071, %v1078
      %vm1081 = vcmp.eq.f32.partialorder %v1071, 0.0
      %v1082 = vand.u32 %v1071, 2147483648
      %v1083 = vsel %vm1081, %v1082, %v1080
      %1084 = vst [vmem:[%s398] sm:$0x1] %v1083
      %p1085 = scmp.lt.s32.totalorder %s21, 1
      %s1086 = scalar_select %p1085, %s21, 1
      %s1087 = smul.addr %s1086, 3
      %s1088 = smul.addr %s1087, 8
      %s1089 = scalar_lea.vmem %s8, %s1088
      %p1090 = scmp.lt.s32.totalorder %s21, 1
      %s1091 = scalar_select %p1090, %s21, 1
      %s1092 = scalar_lea.vmem %s9, %s1091
      // Predicated region
      $region53: #{gm_sv_v2_dense.1} parent=51 // pred_check
        %p1093 = pneg %p227
      $region54: #{gm_sv_v2_dense.1} parent=51 // pred_check_branch
        %1095 = sbr.rel (%p1093) target = $region56
      $region55: #{gm_sv_v2_dense.1} parent=51 // pred_region
        _
      $region56: #{gm_sv_v2_dense.1} parent=51 // pred_fallthru
        _
      // Predicated region
      $region57: #{gm_sv_v2_dense.1} parent=51 // pred_check
        %p1096 = pneg %p253
      $region58: #{gm_sv_v2_dense.1} parent=51 // pred_check_branch
        %1098 = sbr.rel (%p1096) target = $region60
      $region59: #{gm_sv_v2_dense.1} parent=51 // pred_region
        _
      $region60: #{gm_sv_v2_dense.1} parent=51 // pred_fallthru
        _
    $region52: #{gm_sv_v2_dense.1} parent=5 // pred_fallthru
      _
    %p1099 = scmp.le.s32.totalorder 2, %s16
    // Predicated region
    $region61: #{gm_sv_v2_dense.1} parent=5 // pred_check
      %p1100 = pneg %p1099
    $region62: #{gm_sv_v2_dense.1} parent=5 // pred_check_branch
      %1102 = sbr.rel (%p1100) target = $region64
    $region63: #{gm_sv_v2_dense.1} parent=5 // pred_region
      %s1103 = ssub.s32 %s16, 2
      // Predicated region
      $region65: #{gm_sv_v2_dense.1} parent=63 // pred_check
        %p1104 = pneg %p233
      $region66: #{gm_sv_v2_dense.1} parent=63 // pred_check_branch
        %1106 = sbr.rel (%p1104) target = $region68
      $region67: #{gm_sv_v2_dense.1} parent=63 // pred_region
        %p1107 = scmp.lt.s32.totalorder %s22, 1
        %s1108 = scalar_select %p1107, %s22, 1
        %s1109 = smul.addr %s1108, 3
        %s1110 = smul.addr %s1109, 8
        %s1111 = scalar_lea.vmem %s8, %s1110
      $region68: #{gm_sv_v2_dense.1} parent=63 // pred_fallthru
        _
      // Predicated region
      $region69: #{gm_sv_v2_dense.1} parent=63 // pred_check
        %p1112 = pneg %p259
      $region70: #{gm_sv_v2_dense.1} parent=63 // pred_check_branch
        %1114 = sbr.rel (%p1112) target = $region72
      $region71: #{gm_sv_v2_dense.1} parent=63 // pred_region
        %p1115 = scmp.lt.s32.totalorder %s22, 1
        %s1116 = scalar_select %p1115, %s22, 1
        %s1117 = scalar_lea.vmem %s9, %s1116
      $region72: #{gm_sv_v2_dense.1} parent=63 // pred_fallthru
        _
    $region64: #{gm_sv_v2_dense.1} parent=5 // pred_fallthru
      _
  $region6: #{gm_sv_v2_dense.1} parent=0 // loop_footer
    %s20 = sadd.s32 1, %s16
  $region7: #{gm_sv_v2_dense.1} parent=0 // loop_footer_branch
    %15 = sbr.rel target = $region3
  $region8: #{gm_sv_v2_dense.1} parent=0 // loop_exit
    _

</llo_original>
